<compile_context>
chip_gen: v7x
topology: tpu7x:2x2x1
jax: 0.10.0
libtpu: 0.0.40
codegen_flags: <defaults>
</compile_context>

<pallas_src>
import jax
import jax.numpy as jnp
from jax import lax
from jax.experimental import pallas as pl
from jax.experimental.pallas import tpu as pltpu


# ------------------------------- Pallas kernel -------------------------------

def _mlp_decoder_kernel(x_ref, w1T_ref, b1_ref, w2T_ref, b2_ref, w3_ref, b3_ref,
                        outT_ref):
    # x arrives in its natural (TILE_B, D_in) layout; cast + in-VMEM relayout ride
    # free VPU/XLU slots instead of an extra wrapper-side HBM pass.
    x = x_ref[...].astype(jnp.bfloat16)                               # (TB, D_in)

    # Layer 1 on the MXU: contract the feature axis of both operands -> (H1, TB),
    # keeping batch on the lane axis so every downstream op / store is lane-dense.
    h1 = lax.dot_general(w1T_ref[...], x, (((1,), (1,)), ((), ())),
                         preferred_element_type=jnp.float32)          # (H1, TB) f32
    h1 = jnp.maximum(h1 + b1_ref[...], 0.0)                           # bias + ReLU

    # Layer 2: tiny K; plain bf16 MXU with f32 accumulation (HIGHEST buys nothing,
    # the error floor is already set by the bf16 rounding of x and W1).
    h2 = jnp.dot(w2T_ref[...], h1.astype(jnp.bfloat16),
                 preferred_element_type=jnp.float32)                  # (H2, TB) f32
    h2 = jnp.maximum(h2 + b2_ref[...], 0.0)

    # Layer 3: out_dim == 1 would waste the MXU (M=1); do a VPU multiply + sublane
    # reduce (XLU) instead.  Keep a general matmul path for out_dim > 1.
    if w3_ref.shape[1] == 1:
        y = jnp.sum(h2 * w3_ref[...], axis=0, keepdims=True) + b3_ref[...]   # (1, TB)
    else:
        y = lax.dot_general(w3_ref[...], h2, (((0,), (0,)), ((), ())),
                            preferred_element_type=jnp.float32) + b3_ref[...]

    # Lane-dense, unmasked store (last dim = TILE_B, a multiple of 128).
    outT_ref[...] = y.astype(outT_ref.dtype)


# --------------------------------- Wrapper -----------------------------------

def _round_up(n, m):
    return ((n + m - 1) // m) * m


def _mlp_forward_f32(x, params):
    """Plain-JAX (full f32) MLP + squeeze — small-batch fallback, mirrors PyTorch."""
    (w1, b1), (w2, b2), (w3, b3) = params
    hp = lax.Precision.HIGHEST
    h = jnp.maximum(jnp.dot(x, w1, precision=hp) + b1[None, :], 0.0)
    h = jnp.maximum(jnp.dot(h, w2, precision=hp) + b2[None, :], 0.0)
    y = jnp.dot(h, w3, precision=hp) + b3[None, :]
    return y.reshape(-1) if y.shape[-1] == 1 else y


def base_decoder_forward(x, params, *, max_tile_b=8192, min_kernel_batch=1024):
    """BaseDecoder.forward: fused MLP, then squeeze trailing dim if it equals 1."""
    (w1, b1), (w2, b2), (w3, b3) = params
    B, d_in = x.shape
    h1, h2 = w1.shape[1], w2.shape[1]
    out_dim = w3.shape[1]

    # Small batches: kernel fixed overhead + padded lanes dominate; let XLA do it.
    if B < min_kernel_batch:
        return _mlp_forward_f32(x, params)

    # Batch tile: multiple of 128 (lane axis), >= 2 tiles so both v7x TCs get work,
    # capped so double-buffered I/O + f32 intermediates fit every generation's
    # scoped-VMEM default (v5e 16 MiB is the tightest).
    tile_b = min(max_tile_b, max(128, _round_up(pl.cdiv(B, 2), 128)))
    num_tiles = pl.cdiv(B, tile_b)

    # One-time, tiny weight/bias prep (never scales with B).
    w1T = w1.T.astype(jnp.bfloat16)                 # (h1, d_in)
    w2T = w2.T.astype(jnp.bfloat16)                 # (h2, h1)
    w3c = w3.astype(jnp.float32)                    # (h2, out_dim) — VPU path stays f32
    b1c = b1.reshape(h1, 1).astype(jnp.float32)
    b2c = b2.reshape(h2, 1).astype(jnp.float32)
    b3c = b3.reshape(out_dim, 1).astype(jnp.float32)

    # Weights/biases: constant index_map -> resident in VMEM across grid steps.
    def resident(shape):
        return pl.BlockSpec(shape, lambda i: (0, 0))

    itemsize = jnp.dtype(x.dtype).itemsize
    cost = pl.CostEstimate(
        flops=2 * B * (d_in * h1 + h1 * h2 + h2 * out_dim),
        transcendentals=0,
        bytes_accessed=(x.size * itemsize
                        + (w1T.size + w2T.size) * 2
                        + (w3c.size + b1c.size + b2c.size + b3c.size) * 4
                        + B * out_dim * 4),
    )

    outT = pl.pallas_call(
        _mlp_decoder_kernel,
        out_shape=jax.ShapeDtypeStruct((out_dim, B), jnp.float32),
        grid=(num_tiles,),
        in_specs=[
            pl.BlockSpec((tile_b, d_in), lambda i: (i, 0)),   # x: natural layout, pipelined
            resident((h1, d_in)), resident((h1, 1)),
            resident((h2, h1)), resident((h2, 1)),
            resident((h2, out_dim)), resident((out_dim, 1)),
        ],
        out_specs=pl.BlockSpec((out_dim, tile_b), lambda i: (0, i)),
        compiler_params=pltpu.CompilerParams(
            dimension_semantics=("parallel",)),               # v7x: batch tiles on both TCs
        cost_estimate=cost,
    )(x, w1T, b1c, w2T, b2c, w3c, b3c)

    # BaseDecoder.forward: squeeze last dim if it equals 1.
    if out_dim == 1:
        return outT.reshape(B)
    # TODO(synk): out_dim > 1 is unused in this config; if ever used, emit batch-major
    # from the kernel instead of paying this wrapper-side transpose.
    return outT.T


# ------------------------------ Test utilities --------------------------------

def base_decoder_reference(x, params):
    """Pure-JAX reference mirroring the kernel's bf16 rounding points."""
    (w1, b1), (w2, b2), (w3, b3) = params
    rd = lambda a: a.astype(jnp.bfloat16).astype(jnp.float32)
    hp = lax.Precision.HIGHEST
    h = jnp.maximum(jnp.dot(rd(x), rd(w1), precision=hp) + b1[None, :], 0.0)
    h = jnp.maximum(jnp.dot(rd(h), rd(w2), precision=hp) + b2[None, :], 0.0)
    y = jnp.dot(h, w3, precision=hp) + b3[None, :]
    return y.reshape(-1) if y.shape[-1] == 1 else y


def init_mlp_params(key, in_dim, hidden_layers):
    """Deterministic PyTorch-Linear-style init: U(-1/sqrt(fan_in), 1/sqrt(fan_in))."""
    params = []
    dims = [in_dim] + list(hidden_layers)
    for i in range(len(hidden_layers)):
        fan_in, fan_out = dims[i], dims[i + 1]
        key, kw, kb = jax.random.split(key, 3)
        bound = 1.0 / (fan_in ** 0.5)
        w = jax.random.uniform(kw, (fan_in, fan_out), jnp.float32, -bound, bound)
        b = jax.random.uniform(kb, (fan_out,), jnp.float32, -bound, bound)
        params.append((w, b))
    return params


if __name__ == "__main__":
    key = jax.random.PRNGKey(0)
    k_x, k_p, k_x2, k_x3 = jax.random.split(key, 4)

    D_IN = 32
    HIDDEN_LAYERS = [32, 16, 1]  # final size 1 -> squeezed by BaseDecoder.forward
    # TODO(synk): nn.Dropout is a no-op here (config dropout=0.0), so it is omitted.
    params = init_mlp_params(k_p, D_IN, HIDDEN_LAYERS)

    # 1) Small batch (module-scale input): plain-JAX fallback path of the wrapper.
    B = 8
    x = jax.random.normal(k_x, (B, D_IN), jnp.float32)
    y = base_decoder_forward(x, params)
    jax.block_until_ready(y)
    assert y.shape == (B,), y.shape
    assert jnp.allclose(y, _mlp_forward_f32(x, params), atol=1e-5, rtol=1e-5)

    # 2) Kernel path: 2 tiles of 2048 (parallel over both TCs on v7x).
    B2 = 4096
    x2 = jax.random.normal(k_x2, (B2, D_IN), jnp.float32)
    y2 = base_decoder_forward(x2, params)
    jax.block_until_ready(y2)
    ref2 = base_decoder_reference(x2, params)
    assert y2.shape == (B2,), y2.shape
    assert bool(jnp.all(jnp.isfinite(y2)))
    assert jnp.allclose(y2, ref2, atol=1e-4, rtol=1e-4)

    # 3) Kernel path with a partial last tile (B not a multiple of tile_b).
    B3 = 3000
    x3 = jax.random.normal(k_x3, (B3, D_IN), jnp.float32)
    y3 = base_decoder_forward(x3, params)
    jax.block_until_ready(y3)
    ref3 = base_decoder_reference(x3, params)
    assert y3.shape == (B3,), y3.shape
    assert bool(jnp.all(jnp.isfinite(y3)))
    assert jnp.allclose(y3, ref3, atol=1e-4, rtol=1e-4)

    print("KERNEL_OK")
</pallas_src>

<mosaic_0001>
module attributes {stable_mosaic.version = 11 : i64} {
  func.func @_mlp_decoder_kernel(%arg0: i32, %arg1: memref<2048x32xf32, #tpu.memory_space<vmem>>, %arg2: memref<32x32xbf16, #tpu.memory_space<vmem>>, %arg3: memref<32x1xf32, #tpu.memory_space<vmem>>, %arg4: memref<16x32xbf16, #tpu.memory_space<vmem>>, %arg5: memref<16x1xf32, #tpu.memory_space<vmem>>, %arg6: memref<16x1xf32, #tpu.memory_space<vmem>>, %arg7: memref<1x1xf32, #tpu.memory_space<vmem>>, %arg8: memref<1x2048xf32, #tpu.memory_space<vmem>>) attributes {dimension_semantics = [#tpu.dimension_semantics<parallel>], iteration_bounds = array<i64: 2>, scalar_prefetch = 0 : i64, scratch_operands = 0 : i64, tpu.core_type = #tpu.core_type<tc>, window_params = [{transform_indices = @transform_0, window_bounds = array<i64: 2048, 32>}, {pipeline_mode = #tpu.pipeline_mode<synchronous>, transform_indices = @transform_1, window_bounds = array<i64: 32, 32>}, {pipeline_mode = #tpu.pipeline_mode<synchronous>, transform_indices = @transform_2, window_bounds = array<i64: 32, 1>}, {pipeline_mode = #tpu.pipeline_mode<synchronous>, transform_indices = @transform_3, window_bounds = array<i64: 16, 32>}, {pipeline_mode = #tpu.pipeline_mode<synchronous>, transform_indices = @transform_4, window_bounds = array<i64: 16, 1>}, {pipeline_mode = #tpu.pipeline_mode<synchronous>, transform_indices = @transform_5, window_bounds = array<i64: 16, 1>}, {pipeline_mode = #tpu.pipeline_mode<synchronous>, transform_indices = @transform_6, window_bounds = array<i64: 1, 1>}, {transform_indices = @transform_7, window_bounds = array<i64: 1, 2048>}]} {
    %c0 = arith.constant 0 : index
    %c0_0 = arith.constant 0 : index
    %0 = vector.load %arg1[%c0, %c0_0] : memref<2048x32xf32, #tpu.memory_space<vmem>>, vector<2048x32xf32>
    %1 = arith.truncf %0 : vector<2048x32xf32> to vector<2048x32xbf16>
    %c0_1 = arith.constant 0 : index
    %c0_2 = arith.constant 0 : index
    %2 = vector.load %arg2[%c0_1, %c0_2] : memref<32x32xbf16, #tpu.memory_space<vmem>>, vector<32x32xbf16>
    %cst = arith.constant dense<0.000000e+00> : vector<32x2048xf32>
    %3 = tpu.matmul %2, %1, %cst {dimension_numbers = #tpu.dot_dimension_numbers<[1], [1], [0], [0], [0, 0, 1, 0], [], []>} : vector<32x32xbf16>, vector<2048x32xbf16>, vector<32x2048xf32> -> vector<32x2048xf32>
    %c0_3 = arith.constant 0 : index
    %c0_4 = arith.constant 0 : index
    %4 = vector.load %arg3[%c0_3, %c0_4] : memref<32x1xf32, #tpu.memory_space<vmem>>, vector<32x1xf32>
    %5 = vector.broadcast %4 : vector<32x1xf32> to vector<32x2048xf32>
    %6 = arith.addf %3, %5 : vector<32x2048xf32>
    %cst_5 = arith.constant 0.000000e+00 : f32
    %7 = vector.broadcast %cst_5 : f32 to vector<32x2048xf32>
    %8 = arith.maximumf %6, %7 : vector<32x2048xf32>
    %c0_6 = arith.constant 0 : index
    %c0_7 = arith.constant 0 : index
    %9 = vector.load %arg4[%c0_6, %c0_7] : memref<16x32xbf16, #tpu.memory_space<vmem>>, vector<16x32xbf16>
    %10 = arith.truncf %8 : vector<32x2048xf32> to vector<32x2048xbf16>
    %cst_8 = arith.constant dense<0.000000e+00> : vector<16x2048xf32>
    %11 = tpu.matmul %9, %10, %cst_8 {dimension_numbers = #tpu.dot_dimension_numbers<[1], [0], [0], [1], [0, 0, 1, 1], [], []>} : vector<16x32xbf16>, vector<32x2048xbf16>, vector<16x2048xf32> -> vector<16x2048xf32>
    %c0_9 = arith.constant 0 : index
    %c0_10 = arith.constant 0 : index
    %12 = vector.load %arg5[%c0_9, %c0_10] : memref<16x1xf32, #tpu.memory_space<vmem>>, vector<16x1xf32>
    %13 = vector.broadcast %12 : vector<16x1xf32> to vector<16x2048xf32>
    %14 = arith.addf %11, %13 : vector<16x2048xf32>
    %cst_11 = arith.constant 0.000000e+00 : f32
    %15 = vector.broadcast %cst_11 : f32 to vector<16x2048xf32>
    %16 = arith.maximumf %14, %15 : vector<16x2048xf32>
    %c0_12 = arith.constant 0 : index
    %c0_13 = arith.constant 0 : index
    %17 = vector.load %arg6[%c0_12, %c0_13] : memref<16x1xf32, #tpu.memory_space<vmem>>, vector<16x1xf32>
    %18 = vector.broadcast %17 : vector<16x1xf32> to vector<16x2048xf32>
    %19 = arith.mulf %16, %18 : vector<16x2048xf32>
    %cst_14 = arith.constant dense<0.000000e+00> : vector<2048xf32>
    %20 = vector.multi_reduction <add>, %19, %cst_14 [0] : vector<16x2048xf32> to vector<2048xf32>
    %21 = vector.shape_cast %20 : vector<2048xf32> to vector<1x2048xf32>
    %c0_15 = arith.constant 0 : index
    %c0_16 = arith.constant 0 : index
    %22 = vector.load %arg7[%c0_15, %c0_16] : memref<1x1xf32, #tpu.memory_space<vmem>>, vector<1x1xf32>
    %23 = vector.broadcast %22 : vector<1x1xf32> to vector<1x2048xf32>
    %24 = arith.addf %21, %23 : vector<1x2048xf32>
    %c0_17 = arith.constant 0 : index
    %c0_18 = arith.constant 0 : index
    %25 = vector.load %arg8[%c0_17, %c0_18] : memref<1x2048xf32, #tpu.memory_space<vmem>>, vector<1x2048xf32>
    tpu.vector_store %arg8[%c0_17, %c0_18], %24 {strides = array<i32>} : memref<1x2048xf32, #tpu.memory_space<vmem>>, vector<1x2048xf32>,
    return
  }
  func.func @transform_0(%arg0: i32) -> (i32, i32) {
    %c0_i32 = arith.constant 0 : i32
    %c0_i32_0 = arith.constant 0 : i32
    return %arg0, %c0_i32 : i32, i32
  }
  func.func @transform_1(%arg0: i32) -> (i32, i32) {
    %c0_i32 = arith.constant 0 : i32
    %c0_i32_0 = arith.constant 0 : i32
    %c0_i32_1 = arith.constant 0 : i32
    return %c0_i32, %c0_i32_0 : i32, i32
  }
  func.func @transform_2(%arg0: i32) -> (i32, i32) {
    %c0_i32 = arith.constant 0 : i32
    %c0_i32_0 = arith.constant 0 : i32
    %c0_i32_1 = arith.constant 0 : i32
    return %c0_i32, %c0_i32_0 : i32, i32
  }
  func.func @transform_3(%arg0: i32) -> (i32, i32) {
    %c0_i32 = arith.constant 0 : i32
    %c0_i32_0 = arith.constant 0 : i32
    %c0_i32_1 = arith.constant 0 : i32
    return %c0_i32, %c0_i32_0 : i32, i32
  }
  func.func @transform_4(%arg0: i32) -> (i32, i32) {
    %c0_i32 = arith.constant 0 : i32
    %c0_i32_0 = arith.constant 0 : i32
    %c0_i32_1 = arith.constant 0 : i32
    return %c0_i32, %c0_i32_0 : i32, i32
  }
  func.func @transform_5(%arg0: i32) -> (i32, i32) {
    %c0_i32 = arith.constant 0 : i32
    %c0_i32_0 = arith.constant 0 : i32
    %c0_i32_1 = arith.constant 0 : i32
    return %c0_i32, %c0_i32_0 : i32, i32
  }
  func.func @transform_6(%arg0: i32) -> (i32, i32) {
    %c0_i32 = arith.constant 0 : i32
    %c0_i32_0 = arith.constant 0 : i32
    %c0_i32_1 = arith.constant 0 : i32
    return %c0_i32, %c0_i32_0 : i32, i32
  }
  func.func @transform_7(%arg0: i32) -> (i32, i32) {
    %c0_i32 = arith.constant 0 : i32
    %c0_i32_0 = arith.constant 0 : i32
    return %c0_i32, %arg0 : i32, i32
  }
}

</mosaic_0001>

<llo_original>
// kernel: tpu_custom_call.1
$region0: #{tpu_custom_call.1}
  #allocation0 [shape = 'u32[]', space=smem, size = 0x4, offset = 0x4, fixed_abs, tag = 'smem constant byte address 0x4 - core index']
  #allocation1 [shape = 'u32[144,128]{1,0:T(1,128)}', space=vmem, size = 0x12000, scoped, tag = 'internal scratch']
  #allocation2 [shape = 'f32[1,1]{1,0:T(1,128)S(1)}', space=vmem, size = 0x200, scoped, tag = 'scoped memory for tpu_custom_call.1']
  %s0 = inlined_call_operand.vmem [shape: f32[4096,32], index: 0, kind: input, shape index: {}]
  %s1 = inlined_call_operand.vmem [shape: bf16[32,32], index: 1, kind: input, shape index: {}]
  %s2 = inlined_call_operand.vmem [shape: f32[32,1], index: 2, kind: input, shape index: {}]
  %s3 = inlined_call_operand.vmem [shape: bf16[16,32], index: 3, kind: input, shape index: {}]
  %s4 = inlined_call_operand.vmem [shape: f32[16,1], index: 4, kind: input, shape index: {}]
  %s5 = inlined_call_operand.vmem [shape: f32[16,1], index: 5, kind: input, shape index: {}]
  %s6 = inlined_call_operand.<no memory space> [shape: f32[1,1], index: 6, kind: input, shape index: {}]
  %s7 = inlined_call_operand.hbm [shape: f32[1,4096], index: 7, kind: output, shape index: {}]
  %s8 = sld [smem:[#allocation0]]
  $region61: #{tpu_custom_call.1} parent=0
    _
  %s10 = ssub.s32 1, %s8
  %s11 = scalar_select 0, %s10, %s8
  %v12 = vstv %s6
  %13 = vst [vmem:[#allocation2] sm:$0x1] %v12
  $region1: #{tpu_custom_call.1} parent=0
    #allocation3 [shape = 'u8[16384]{0}', space=vmem, size = 0x4000, scoped, tag = 'output window, operand 0']
    #allocation4 [shape = 's32[2]{0}', space=sflag, size = 0x8, scoped, tag = 'scoped memory for tpu_custom_call.1']
    %14 = vsyncpa [#allocation4], 0
    %s15 = scalar_lea.sflag [#allocation4], 1
    %16 = vsyncpa %s15, 0
    loop: start=0, step=1, limit=4
    $region2: #{tpu_custom_call.1} parent=1 // loop_pre_header
      _
    $region3: #{tpu_custom_call.1} parent=1 // loop_header
      %s18 = sphi 0, %s22
      %p19 = scmp.ge.s32.totalorder %s18, 4
      %s28 = sphi 0, %s30
      %s31 = sphi 0, %s28
      %s32 = sphi 0, %s31
      %s48 = sphi 0, %s32
      %s52 = sphi 0, %s52
      %s54 = sphi 0, %s52
      %s55 = sphi 0, %s54
      %s69 = sphi 0, %s55
      %s73 = sphi 0, %s73
      %s75 = sphi 0, %s73
      %s76 = sphi 0, %s75
      %s90 = sphi 0, %s76
      %s94 = sphi 0, %s94
      %s96 = sphi 0, %s94
      %s97 = sphi 0, %s96
      %s111 = sphi 0, %s97
      %s115 = sphi 0, %s115
      %s117 = sphi 0, %s115
      %s118 = sphi 0, %s117
      %s132 = sphi 0, %s118
      %s136 = sphi 0, %s136
      %s138 = sphi 0, %s136
      %s139 = sphi 0, %s138
      %s153 = sphi 0, %s139
      %s157 = sphi 0, %s157
      %s159 = sphi 0, %s157
      %s160 = sphi 0, %s159
      %s174 = sphi 0, %s160
      %s180 = sphi 0, %s182
      %s183 = sphi 0, %s180
      %s184 = sphi 0, %s183
      %s200 = sphi 0, %s184
    $region4: #{tpu_custom_call.1} parent=1 // loop_header_branch
      %21 = sbr.rel (%p19) target = $region8
    $region5: #{tpu_custom_call.1} parent=1 // loop_body
      %s23 = ssub.s32 %s18, 1
      %s24 = ssub.s32 %s18, 2
      %s25 = sadd.s32 %s18, 1
      %s26 = ssub.s32 %s18, %s25
      %p27 = scmp.eq.s32.totalorder %s26, 0
      %s29 = sadd.s32 %s28, 1
      %s30 = scalar_select %p27, %s28, %s29
      %p33 = pneg %p27
      %p34 = scmp.eq.s32.totalorder %s18, 1
      %p35 = por %p33, %p34
      %p36 = scmp.ne.s32.totalorder %s28, %s31
      %p37 = scmp.eq.s32.totalorder %s18, 0
      %p38 = por %p36, %p37
      %p39 = scmp.ne.s32.totalorder %s28, %s31
      %p40 = scmp.eq.s32.totalorder %s23, 1
      %p41 = por %p39, %p40
      %p42 = scmp.ne.s32.totalorder %s31, %s32
      %p43 = scmp.eq.s32.totalorder %s23, 0
      %p44 = por %p42, %p43
      %p45 = scmp.ne.s32.totalorder %s31, %s32
      %p46 = scmp.eq.s32.totalorder %s24, 1
      %p47 = por %p45, %p46
      %p49 = scmp.ne.s32.totalorder %s32, %s48
      %p50 = scmp.eq.s32.totalorder %s24, 0
      %p51 = por %p49, %p50
      %s53 = sadd.s32 %s52, 1
      %p56 = scmp.eq.s32.totalorder %s18, 1
      %p57 = scmp.ne.s32.totalorder %s52, %s54
      %p58 = scmp.eq.s32.totalorder %s18, 0
      %p59 = por %p57, %p58
      %p60 = scmp.ne.s32.totalorder %s52, %s54
      %p61 = scmp.eq.s32.totalorder %s23, 1
      %p62 = por %p60, %p61
      %p63 = scmp.ne.s32.totalorder %s54, %s55
      %p64 = scmp.eq.s32.totalorder %s23, 0
      %p65 = por %p63, %p64
      %p66 = scmp.ne.s32.totalorder %s54, %s55
      %p67 = scmp.eq.s32.totalorder %s24, 1
      %p68 = por %p66, %p67
      %p70 = scmp.ne.s32.totalorder %s55, %s69
      %p71 = scmp.eq.s32.totalorder %s24, 0
      %p72 = por %p70, %p71
      %s74 = sadd.s32 %s73, 1
      %p77 = scmp.eq.s32.totalorder %s18, 1
      %p78 = scmp.ne.s32.totalorder %s73, %s75
      %p79 = scmp.eq.s32.totalorder %s18, 0
      %p80 = por %p78, %p79
      %p81 = scmp.ne.s32.totalorder %s73, %s75
      %p82 = scmp.eq.s32.totalorder %s23, 1
      %p83 = por %p81, %p82
      %p84 = scmp.ne.s32.totalorder %s75, %s76
      %p85 = scmp.eq.s32.totalorder %s23, 0
      %p86 = por %p84, %p85
      %p87 = scmp.ne.s32.totalorder %s75, %s76
      %p88 = scmp.eq.s32.totalorder %s24, 1
      %p89 = por %p87, %p88
      %p91 = scmp.ne.s32.totalorder %s76, %s90
      %p92 = scmp.eq.s32.totalorder %s24, 0
      %p93 = por %p91, %p92
      %s95 = sadd.s32 %s94, 1
      %p98 = scmp.eq.s32.totalorder %s18, 1
      %p99 = scmp.ne.s32.totalorder %s94, %s96
      %p100 = scmp.eq.s32.totalorder %s18, 0
      %p101 = por %p99, %p100
      %p102 = scmp.ne.s32.totalorder %s94, %s96
      %p103 = scmp.eq.s32.totalorder %s23, 1
      %p104 = por %p102, %p103
      %p105 = scmp.ne.s32.totalorder %s96, %s97
      %p106 = scmp.eq.s32.totalorder %s23, 0
      %p107 = por %p105, %p106
      %p108 = scmp.ne.s32.totalorder %s96, %s97
      %p109 = scmp.eq.s32.totalorder %s24, 1
      %p110 = por %p108, %p109
      %p112 = scmp.ne.s32.totalorder %s97, %s111
      %p113 = scmp.eq.s32.totalorder %s24, 0
      %p114 = por %p112, %p113
      %s116 = sadd.s32 %s115, 1
      %p119 = scmp.eq.s32.totalorder %s18, 1
      %p120 = scmp.ne.s32.totalorder %s115, %s117
      %p121 = scmp.eq.s32.totalorder %s18, 0
      %p122 = por %p120, %p121
      %p123 = scmp.ne.s32.totalorder %s115, %s117
      %p124 = scmp.eq.s32.totalorder %s23, 1
      %p125 = por %p123, %p124
      %p126 = scmp.ne.s32.totalorder %s117, %s118
      %p127 = scmp.eq.s32.totalorder %s23, 0
      %p128 = por %p126, %p127
      %p129 = scmp.ne.s32.totalorder %s117, %s118
      %p130 = scmp.eq.s32.totalorder %s24, 1
      %p131 = por %p129, %p130
      %p133 = scmp.ne.s32.totalorder %s118, %s132
      %p134 = scmp.eq.s32.totalorder %s24, 0
      %p135 = por %p133, %p134
      %s137 = sadd.s32 %s136, 1
      %p140 = scmp.eq.s32.totalorder %s18, 1
      %p141 = scmp.ne.s32.totalorder %s136, %s138
      %p142 = scmp.eq.s32.totalorder %s18, 0
      %p143 = por %p141, %p142
      %p144 = scmp.ne.s32.totalorder %s136, %s138
      %p145 = scmp.eq.s32.totalorder %s23, 1
      %p146 = por %p144, %p145
      %p147 = scmp.ne.s32.totalorder %s138, %s139
      %p148 = scmp.eq.s32.totalorder %s23, 0
      %p149 = por %p147, %p148
      %p150 = scmp.ne.s32.totalorder %s138, %s139
      %p151 = scmp.eq.s32.totalorder %s24, 1
      %p152 = por %p150, %p151
      %p154 = scmp.ne.s32.totalorder %s139, %s153
      %p155 = scmp.eq.s32.totalorder %s24, 0
      %p156 = por %p154, %p155
      %s158 = sadd.s32 %s157, 1
      %p161 = scmp.eq.s32.totalorder %s18, 1
      %p162 = scmp.ne.s32.totalorder %s157, %s159
      %p163 = scmp.eq.s32.totalorder %s18, 0
      %p164 = por %p162, %p163
      %p165 = scmp.ne.s32.totalorder %s157, %s159
      %p166 = scmp.eq.s32.totalorder %s23, 1
      %p167 = por %p165, %p166
      %p168 = scmp.ne.s32.totalorder %s159, %s160
      %p169 = scmp.eq.s32.totalorder %s23, 0
      %p170 = por %p168, %p169
      %p171 = scmp.ne.s32.totalorder %s159, %s160
      %p172 = scmp.eq.s32.totalorder %s24, 1
      %p173 = por %p171, %p172
      %p175 = scmp.ne.s32.totalorder %s160, %s174
      %p176 = scmp.eq.s32.totalorder %s24, 0
      %p177 = por %p175, %p176
      %s178 = ssub.s32 %s18, %s25
      %p179 = scmp.eq.s32.totalorder %s178, 0
      %s181 = sadd.s32 %s180, 1
      %s182 = scalar_select %p179, %s180, %s181
      %p185 = pneg %p179
      %p186 = scmp.eq.s32.totalorder %s18, 1
      %p187 = por %p185, %p186
      %p188 = scmp.ne.s32.totalorder %s180, %s183
      %p189 = scmp.eq.s32.totalorder %s18, 0
      %p190 = por %p188, %p189
      %p191 = scmp.ne.s32.totalorder %s180, %s183
      %p192 = scmp.eq.s32.totalorder %s23, 1
      %p193 = por %p191, %p192
      %p194 = scmp.ne.s32.totalorder %s183, %s184
      %p195 = scmp.eq.s32.totalorder %s23, 0
      %p196 = por %p194, %p195
      %p197 = scmp.ne.s32.totalorder %s183, %s184
      %p198 = scmp.eq.s32.totalorder %s24, 1
      %p199 = por %p197, %p198
      %p201 = scmp.ne.s32.totalorder %s184, %s200
      %p202 = scmp.eq.s32.totalorder %s24, 0
      %p203 = por %p201, %p202
      %p204 = scmp.le.s32.totalorder 1, %s18
      %p205 = scmp.lt.s32.totalorder %s18, 3
      %p206 = pnand %p204, %p205
      %p207 = pneg %p206
      // Predicated region
      $region9: #{tpu_custom_call.1} parent=5 // pred_check
        _
      $region10: #{tpu_custom_call.1} parent=5 // pred_check_branch
        %209 = sbr.rel (%p206) target = $region12
      $region11: #{tpu_custom_call.1} parent=5 // pred_region
        %s210 = ssub.s32 %s18, 1
        // Predicated region
        $region13: #{tpu_custom_call.1} parent=11 // pred_check
          %p211 = pneg %p65
        $region14: #{tpu_custom_call.1} parent=11 // pred_check_branch
          %213 = sbr.rel (%p211) target = $region16
        $region15: #{tpu_custom_call.1} parent=11 // pred_region
          _
        $region16: #{tpu_custom_call.1} parent=11 // pred_fallthru
          _
        // Predicated region
        $region17: #{tpu_custom_call.1} parent=11 // pred_check
          %p214 = pneg %p86
        $region18: #{tpu_custom_call.1} parent=11 // pred_check_branch
          %216 = sbr.rel (%p214) target = $region20
        $region19: #{tpu_custom_call.1} parent=11 // pred_region
          _
        $region20: #{tpu_custom_call.1} parent=11 // pred_fallthru
          _
        // Predicated region
        $region21: #{tpu_custom_call.1} parent=11 // pred_check
          %p217 = pneg %p107
        $region22: #{tpu_custom_call.1} parent=11 // pred_check_branch
          %219 = sbr.rel (%p217) target = $region24
        $region23: #{tpu_custom_call.1} parent=11 // pred_region
          _
        $region24: #{tpu_custom_call.1} parent=11 // pred_fallthru
          _
        // Predicated region
        $region25: #{tpu_custom_call.1} parent=11 // pred_check
          %p220 = pneg %p128
        $region26: #{tpu_custom_call.1} parent=11 // pred_check_branch
          %222 = sbr.rel (%p220) target = $region28
        $region27: #{tpu_custom_call.1} parent=11 // pred_region
          _
        $region28: #{tpu_custom_call.1} parent=11 // pred_fallthru
          _
        // Predicated region
        $region29: #{tpu_custom_call.1} parent=11 // pred_check
          %p223 = pneg %p149
        $region30: #{tpu_custom_call.1} parent=11 // pred_check_branch
          %225 = sbr.rel (%p223) target = $region32
        $region31: #{tpu_custom_call.1} parent=11 // pred_region
          _
        $region32: #{tpu_custom_call.1} parent=11 // pred_fallthru
          _
        // Predicated region
        $region33: #{tpu_custom_call.1} parent=11 // pred_check
          %p226 = pneg %p170
        $region34: #{tpu_custom_call.1} parent=11 // pred_check_branch
          %228 = sbr.rel (%p226) target = $region36
        $region35: #{tpu_custom_call.1} parent=11 // pred_region
          _
        $region36: #{tpu_custom_call.1} parent=11 // pred_fallthru
          _
      $region12: #{tpu_custom_call.1} parent=5 // pred_fallthru
        _
      %p229 = scmp.lt.s32.totalorder %s18, 2
      // Predicated region
      $region37: #{tpu_custom_call.1} parent=5 // pred_check
        %p230 = pneg %p229
      $region38: #{tpu_custom_call.1} parent=5 // pred_check_branch
        %232 = sbr.rel (%p230) target = $region40
      $region39: #{tpu_custom_call.1} parent=5 // pred_region
        // Predicated region
        $region41: #{tpu_custom_call.1} parent=39 // pred_check
          %p233 = pneg %p38
        $region42: #{tpu_custom_call.1} parent=39 // pred_check_branch
          %235 = sbr.rel (%p233) target = $region44
        $region43: #{tpu_custom_call.1} parent=39 // pred_region
          %s236 = smul.u32 256, %s18
          %p237 = scmp.lt.s32.totalorder %s236, 511
          %s238 = scalar_select %p237, %s236, 511
          %s239 = smul.addr %s238, 8
          %s240 = scalar_lea.vmem %s0, %s239
          %s241 = smul.u32 256, %s18
        $region44: #{tpu_custom_call.1} parent=39 // pred_fallthru
          _
      $region40: #{tpu_custom_call.1} parent=5 // pred_fallthru
        _
      %p242 = scmp.le.s32.totalorder 1, %s18
      %p243 = scmp.lt.s32.totalorder %s18, 3
      %p244 = pnand %p242, %p243
      %p245 = pneg %p244
      // Predicated region
      $region45: #{tpu_custom_call.1} parent=5 // pred_check
        _
      $region46: #{tpu_custom_call.1} parent=5 // pred_check_branch
        %247 = sbr.rel (%p244) target = $region48
      $region47: #{tpu_custom_call.1} parent=5 // pred_region
        %s248 = ssub.s32 %s18, 1
        %s249 = smul.u32 256, %s23
        %p250 = scmp.lt.s32.totalorder %s249, 511
        %s251 = scalar_select %p250, %s249, 511
        %s252 = smul.addr %s251, 8
        %s253 = scalar_lea.vmem %s0, %s252
        %p254 = pneg %p44
        %p255 = pneg %p41
        %p256 = pneg %p65
        %p257 = pneg %p62
        %p258 = pneg %p86
        %p259 = pneg %p83
        %p260 = pneg %p107
        %p261 = pneg %p104
        %p262 = pneg %p128
        %p263 = pneg %p125
        %p264 = pneg %p149
        %p265 = pneg %p146
        %p266 = pneg %p170
        %p267 = pneg %p167
        %p268 = pneg %p196
        %p269 = pneg %p193
        %s270 = sand.u32 %s183, 1
        %s271 = scalar_lea.sflag [#allocation4], %s270
        %s272 = sand.u32 %s183, 1
        %s273 = smul.addr %s272, 16
        %s274 = scalar_lea.vmem [#allocation3], %s273
        %s275 = smul.u32 256, %s23
        %p276 = scmp.lt.s32.totalorder %s275, 511
        %s277 = scalar_select %p276, %s275, 511
        %s278 = smul.addr %s277, 8
        %s279 = scalar_lea.vmem %s0, %s278
        %s280 = smul.u32 256, %s23
        %s281 = smul.u32 16, %s23
        %v283 = vld [vmem:[%s279] sm:$0xff]
        %v284 = vld [vmem:[%s279 + $0x8] sm:$0xff]
        %v285 = vld [vmem:[%s279 + $0x10] sm:$0xff]
        %v286 = vld [vmem:[%s279 + $0x18] sm:$0xff]
        %v287 = vld [vmem:[%s279 + $0x20] sm:$0xff]
        %v288 = vld [vmem:[%s279 + $0x28] sm:$0xff]
        %v289 = vld [vmem:[%s279 + $0x30] sm:$0xff]
        %v290 = vld [vmem:[%s279 + $0x38] sm:$0xff]
        %v291 = vld [vmem:[%s279 + $0x40] sm:$0xff]
        %v292 = vld [vmem:[%s279 + $0x48] sm:$0xff]
        %v293 = vld [vmem:[%s279 + $0x50] sm:$0xff]
        %v294 = vld [vmem:[%s279 + $0x58] sm:$0xff]
        %v295 = vld [vmem:[%s279 + $0x60] sm:$0xff]
        %v296 = vld [vmem:[%s279 + $0x68] sm:$0xff]
        %v297 = vld [vmem:[%s279 + $0x70] sm:$0xff]
        %v298 = vld [vmem:[%s279 + $0x78] sm:$0xff]
        %v299 = vld [vmem:[%s279 + $0x80] sm:$0xff]
        %v300 = vld [vmem:[%s279 + $0x88] sm:$0xff]
        %v301 = vld [vmem:[%s279 + $0x90] sm:$0xff]
        %v302 = vld [vmem:[%s279 + $0x98] sm:$0xff]
        %v303 = vld [vmem:[%s279 + $0xa0] sm:$0xff]
        %v304 = vld [vmem:[%s279 + $0xa8] sm:$0xff]
        %v305 = vld [vmem:[%s279 + $0xb0] sm:$0xff]
        %v306 = vld [vmem:[%s279 + $0xb8] sm:$0xff]
        %v307 = vld [vmem:[%s279 + $0xc0] sm:$0xff]
        %v308 = vld [vmem:[%s279 + $0xc8] sm:$0xff]
        %v309 = vld [vmem:[%s279 + $0xd0] sm:$0xff]
        %v310 = vld [vmem:[%s279 + $0xd8] sm:$0xff]
        %v311 = vld [vmem:[%s279 + $0xe0] sm:$0xff]
        %v312 = vld [vmem:[%s279 + $0xe8] sm:$0xff]
        %v313 = vld [vmem:[%s279 + $0xf0] sm:$0xff]
        %v314 = vld [vmem:[%s279 + $0xf8] sm:$0xff]
        %v315 = vld [vmem:[%s279 + $0x100] sm:$0xff]
        %v316 = vld [vmem:[%s279 + $0x108] sm:$0xff]
        %v317 = vld [vmem:[%s279 + $0x110] sm:$0xff]
        %v318 = vld [vmem:[%s279 + $0x118] sm:$0xff]
        %v319 = vld [vmem:[%s279 + $0x120] sm:$0xff]
        %v320 = vld [vmem:[%s279 + $0x128] sm:$0xff]
        %v321 = vld [vmem:[%s279 + $0x130] sm:$0xff]
        %v322 = vld [vmem:[%s279 + $0x138] sm:$0xff]
        %v323 = vld [vmem:[%s279 + $0x140] sm:$0xff]
        %v324 = vld [vmem:[%s279 + $0x148] sm:$0xff]
        %v325 = vld [vmem:[%s279 + $0x150] sm:$0xff]
        %v326 = vld [vmem:[%s279 + $0x158] sm:$0xff]
        %v327 = vld [vmem:[%s279 + $0x160] sm:$0xff]
        %v328 = vld [vmem:[%s279 + $0x168] sm:$0xff]
        %v329 = vld [vmem:[%s279 + $0x170] sm:$0xff]
        %v330 = vld [vmem:[%s279 + $0x178] sm:$0xff]
        %v331 = vld [vmem:[%s279 + $0x180] sm:$0xff]
        %v332 = vld [vmem:[%s279 + $0x188] sm:$0xff]
        %v333 = vld [vmem:[%s279 + $0x190] sm:$0xff]
        %v334 = vld [vmem:[%s279 + $0x198] sm:$0xff]
        %v335 = vld [vmem:[%s279 + $0x1a0] sm:$0xff]
        %v336 = vld [vmem:[%s279 + $0x1a8] sm:$0xff]
        %v337 = vld [vmem:[%s279 + $0x1b0] sm:$0xff]
        %v338 = vld [vmem:[%s279 + $0x1b8] sm:$0xff]
        %v339 = vld [vmem:[%s279 + $0x1c0] sm:$0xff]
        %v340 = vld [vmem:[%s279 + $0x1c8] sm:$0xff]
        %v341 = vld [vmem:[%s279 + $0x1d0] sm:$0xff]
        %v342 = vld [vmem:[%s279 + $0x1d8] sm:$0xff]
        %v343 = vld [vmem:[%s279 + $0x1e0] sm:$0xff]
        %v344 = vld [vmem:[%s279 + $0x1e8] sm:$0xff]
        %v345 = vld [vmem:[%s279 + $0x1f0] sm:$0xff]
        %v346 = vld [vmem:[%s279 + $0x1f8] sm:$0xff]
        %v347 = vld [vmem:[%s279 + $0x200] sm:$0xff]
        %v348 = vld [vmem:[%s279 + $0x208] sm:$0xff]
        %v349 = vld [vmem:[%s279 + $0x210] sm:$0xff]
        %v350 = vld [vmem:[%s279 + $0x218] sm:$0xff]
        %v351 = vld [vmem:[%s279 + $0x220] sm:$0xff]
        %v352 = vld [vmem:[%s279 + $0x228] sm:$0xff]
        %v353 = vld [vmem:[%s279 + $0x230] sm:$0xff]
        %v354 = vld [vmem:[%s279 + $0x238] sm:$0xff]
        %v355 = vld [vmem:[%s279 + $0x240] sm:$0xff]
        %v356 = vld [vmem:[%s279 + $0x248] sm:$0xff]
        %v357 = vld [vmem:[%s279 + $0x250] sm:$0xff]
        %v358 = vld [vmem:[%s279 + $0x258] sm:$0xff]
        %v359 = vld [vmem:[%s279 + $0x260] sm:$0xff]
        %v360 = vld [vmem:[%s279 + $0x268] sm:$0xff]
        %v361 = vld [vmem:[%s279 + $0x270] sm:$0xff]
        %v362 = vld [vmem:[%s279 + $0x278] sm:$0xff]
        %v363 = vld [vmem:[%s279 + $0x280] sm:$0xff]
        %v364 = vld [vmem:[%s279 + $0x288] sm:$0xff]
        %v365 = vld [vmem:[%s279 + $0x290] sm:$0xff]
        %v366 = vld [vmem:[%s279 + $0x298] sm:$0xff]
        %v367 = vld [vmem:[%s279 + $0x2a0] sm:$0xff]
        %v368 = vld [vmem:[%s279 + $0x2a8] sm:$0xff]
        %v369 = vld [vmem:[%s279 + $0x2b0] sm:$0xff]
        %v370 = vld [vmem:[%s279 + $0x2b8] sm:$0xff]
        %v371 = vld [vmem:[%s279 + $0x2c0] sm:$0xff]
        %v372 = vld [vmem:[%s279 + $0x2c8] sm:$0xff]
        %v373 = vld [vmem:[%s279 + $0x2d0] sm:$0xff]
        %v374 = vld [vmem:[%s279 + $0x2d8] sm:$0xff]
        %v375 = vld [vmem:[%s279 + $0x2e0] sm:$0xff]
        %v376 = vld [vmem:[%s279 + $0x2e8] sm:$0xff]
        %v377 = vld [vmem:[%s279 + $0x2f0] sm:$0xff]
        %v378 = vld [vmem:[%s279 + $0x2f8] sm:$0xff]
        %v379 = vld [vmem:[%s279 + $0x300] sm:$0xff]
        %v380 = vld [vmem:[%s279 + $0x308] sm:$0xff]
        %v381 = vld [vmem:[%s279 + $0x310] sm:$0xff]
        %v382 = vld [vmem:[%s279 + $0x318] sm:$0xff]
        %v383 = vld [vmem:[%s279 + $0x320] sm:$0xff]
        %v384 = vld [vmem:[%s279 + $0x328] sm:$0xff]
        %v385 = vld [vmem:[%s279 + $0x330] sm:$0xff]
        %v386 = vld [vmem:[%s279 + $0x338] sm:$0xff]
        %v387 = vld [vmem:[%s279 + $0x340] sm:$0xff]
        %v388 = vld [vmem:[%s279 + $0x348] sm:$0xff]
        %v389 = vld [vmem:[%s279 + $0x350] sm:$0xff]
        %v390 = vld [vmem:[%s279 + $0x358] sm:$0xff]
        %v391 = vld [vmem:[%s279 + $0x360] sm:$0xff]
        %v392 = vld [vmem:[%s279 + $0x368] sm:$0xff]
        %v393 = vld [vmem:[%s279 + $0x370] sm:$0xff]
        %v394 = vld [vmem:[%s279 + $0x378] sm:$0xff]
        %v395 = vld [vmem:[%s279 + $0x380] sm:$0xff]
        %v396 = vld [vmem:[%s279 + $0x388] sm:$0xff]
        %v397 = vld [vmem:[%s279 + $0x390] sm:$0xff]
        %v398 = vld [vmem:[%s279 + $0x398] sm:$0xff]
        %v399 = vld [vmem:[%s279 + $0x3a0] sm:$0xff]
        %v400 = vld [vmem:[%s279 + $0x3a8] sm:$0xff]
        %v401 = vld [vmem:[%s279 + $0x3b0] sm:$0xff]
        %v402 = vld [vmem:[%s279 + $0x3b8] sm:$0xff]
        %v403 = vld [vmem:[%s279 + $0x3c0] sm:$0xff]
        %v404 = vld [vmem:[%s279 + $0x3c8] sm:$0xff]
        %v405 = vld [vmem:[%s279 + $0x3d0] sm:$0xff]
        %v406 = vld [vmem:[%s279 + $0x3d8] sm:$0xff]
        %v407 = vld [vmem:[%s279 + $0x3e0] sm:$0xff]
        %v408 = vld [vmem:[%s279 + $0x3e8] sm:$0xff]
        %v409 = vld [vmem:[%s279 + $0x3f0] sm:$0xff]
        %v410 = vld [vmem:[%s279 + $0x3f8] sm:$0xff]
        %v411 = vld [vmem:[%s279 + $0x400] sm:$0xff]
        %v412 = vld [vmem:[%s279 + $0x408] sm:$0xff]
        %v413 = vld [vmem:[%s279 + $0x410] sm:$0xff]
        %v414 = vld [vmem:[%s279 + $0x418] sm:$0xff]
        %v415 = vld [vmem:[%s279 + $0x420] sm:$0xff]
        %v416 = vld [vmem:[%s279 + $0x428] sm:$0xff]
        %v417 = vld [vmem:[%s279 + $0x430] sm:$0xff]
        %v418 = vld [vmem:[%s279 + $0x438] sm:$0xff]
        %v419 = vld [vmem:[%s279 + $0x440] sm:$0xff]
        %v420 = vld [vmem:[%s279 + $0x448] sm:$0xff]
        %v421 = vld [vmem:[%s279 + $0x450] sm:$0xff]
        %v422 = vld [vmem:[%s279 + $0x458] sm:$0xff]
        %v423 = vld [vmem:[%s279 + $0x460] sm:$0xff]
        %v424 = vld [vmem:[%s279 + $0x468] sm:$0xff]
        %v425 = vld [vmem:[%s279 + $0x470] sm:$0xff]
        %v426 = vld [vmem:[%s279 + $0x478] sm:$0xff]
        %v427 = vld [vmem:[%s279 + $0x480] sm:$0xff]
        %v428 = vld [vmem:[%s279 + $0x488] sm:$0xff]
        %v429 = vld [vmem:[%s279 + $0x490] sm:$0xff]
        %v430 = vld [vmem:[%s279 + $0x498] sm:$0xff]
        %v431 = vld [vmem:[%s279 + $0x4a0] sm:$0xff]
        %v432 = vld [vmem:[%s279 + $0x4a8] sm:$0xff]
        %v433 = vld [vmem:[%s279 + $0x4b0] sm:$0xff]
        %v434 = vld [vmem:[%s279 + $0x4b8] sm:$0xff]
        %v435 = vld [vmem:[%s279 + $0x4c0] sm:$0xff]
        %v436 = vld [vmem:[%s279 + $0x4c8] sm:$0xff]
        %v437 = vld [vmem:[%s279 + $0x4d0] sm:$0xff]
        %v438 = vld [vmem:[%s279 + $0x4d8] sm:$0xff]
        %v439 = vld [vmem:[%s279 + $0x4e0] sm:$0xff]
        %v440 = vld [vmem:[%s279 + $0x4e8] sm:$0xff]
        %v441 = vld [vmem:[%s279 + $0x4f0] sm:$0xff]
        %v442 = vld [vmem:[%s279 + $0x4f8] sm:$0xff]
        %v443 = vld [vmem:[%s279 + $0x500] sm:$0xff]
        %v444 = vld [vmem:[%s279 + $0x508] sm:$0xff]
        %v445 = vld [vmem:[%s279 + $0x510] sm:$0xff]
        %v446 = vld [vmem:[%s279 + $0x518] sm:$0xff]
        %v447 = vld [vmem:[%s279 + $0x520] sm:$0xff]
        %v448 = vld [vmem:[%s279 + $0x528] sm:$0xff]
        %v449 = vld [vmem:[%s279 + $0x530] sm:$0xff]
        %v450 = vld [vmem:[%s279 + $0x538] sm:$0xff]
        %v451 = vld [vmem:[%s279 + $0x540] sm:$0xff]
        %v452 = vld [vmem:[%s279 + $0x548] sm:$0xff]
        %v453 = vld [vmem:[%s279 + $0x550] sm:$0xff]
        %v454 = vld [vmem:[%s279 + $0x558] sm:$0xff]
        %v455 = vld [vmem:[%s279 + $0x560] sm:$0xff]
        %v456 = vld [vmem:[%s279 + $0x568] sm:$0xff]
        %v457 = vld [vmem:[%s279 + $0x570] sm:$0xff]
        %v458 = vld [vmem:[%s279 + $0x578] sm:$0xff]
        %v459 = vld [vmem:[%s279 + $0x580] sm:$0xff]
        %v460 = vld [vmem:[%s279 + $0x588] sm:$0xff]
        %v461 = vld [vmem:[%s279 + $0x590] sm:$0xff]
        %v462 = vld [vmem:[%s279 + $0x598] sm:$0xff]
        %v463 = vld [vmem:[%s279 + $0x5a0] sm:$0xff]
        %v464 = vld [vmem:[%s279 + $0x5a8] sm:$0xff]
        %v465 = vld [vmem:[%s279 + $0x5b0] sm:$0xff]
        %v466 = vld [vmem:[%s279 + $0x5b8] sm:$0xff]
        %v467 = vld [vmem:[%s279 + $0x5c0] sm:$0xff]
        %v468 = vld [vmem:[%s279 + $0x5c8] sm:$0xff]
        %v469 = vld [vmem:[%s279 + $0x5d0] sm:$0xff]
        %v470 = vld [vmem:[%s279 + $0x5d8] sm:$0xff]
        %v471 = vld [vmem:[%s279 + $0x5e0] sm:$0xff]
        %v472 = vld [vmem:[%s279 + $0x5e8] sm:$0xff]
        %v473 = vld [vmem:[%s279 + $0x5f0] sm:$0xff]
        %v474 = vld [vmem:[%s279 + $0x5f8] sm:$0xff]
        %v475 = vld [vmem:[%s279 + $0x600] sm:$0xff]
        %v476 = vld [vmem:[%s279 + $0x608] sm:$0xff]
        %v477 = vld [vmem:[%s279 + $0x610] sm:$0xff]
        %v478 = vld [vmem:[%s279 + $0x618] sm:$0xff]
        %v479 = vld [vmem:[%s279 + $0x620] sm:$0xff]
        %v480 = vld [vmem:[%s279 + $0x628] sm:$0xff]
        %v481 = vld [vmem:[%s279 + $0x630] sm:$0xff]
        %v482 = vld [vmem:[%s279 + $0x638] sm:$0xff]
        %v483 = vld [vmem:[%s279 + $0x640] sm:$0xff]
        %v484 = vld [vmem:[%s279 + $0x648] sm:$0xff]
        %v485 = vld [vmem:[%s279 + $0x650] sm:$0xff]
        %v486 = vld [vmem:[%s279 + $0x658] sm:$0xff]
        %v487 = vld [vmem:[%s279 + $0x660] sm:$0xff]
        %v488 = vld [vmem:[%s279 + $0x668] sm:$0xff]
        %v489 = vld [vmem:[%s279 + $0x670] sm:$0xff]
        %v490 = vld [vmem:[%s279 + $0x678] sm:$0xff]
        %v491 = vld [vmem:[%s279 + $0x680] sm:$0xff]
        %v492 = vld [vmem:[%s279 + $0x688] sm:$0xff]
        %v493 = vld [vmem:[%s279 + $0x690] sm:$0xff]
        %v494 = vld [vmem:[%s279 + $0x698] sm:$0xff]
        %v495 = vld [vmem:[%s279 + $0x6a0] sm:$0xff]
        %v496 = vld [vmem:[%s279 + $0x6a8] sm:$0xff]
        %v497 = vld [vmem:[%s279 + $0x6b0] sm:$0xff]
        %v498 = vld [vmem:[%s279 + $0x6b8] sm:$0xff]
        %v499 = vld [vmem:[%s279 + $0x6c0] sm:$0xff]
        %v500 = vld [vmem:[%s279 + $0x6c8] sm:$0xff]
        %v501 = vld [vmem:[%s279 + $0x6d0] sm:$0xff]
        %v502 = vld [vmem:[%s279 + $0x6d8] sm:$0xff]
        %v503 = vld [vmem:[%s279 + $0x6e0] sm:$0xff]
        %v504 = vld [vmem:[%s279 + $0x6e8] sm:$0xff]
        %v505 = vld [vmem:[%s279 + $0x6f0] sm:$0xff]
        %v506 = vld [vmem:[%s279 + $0x6f8] sm:$0xff]
        %v507 = vld [vmem:[%s279 + $0x700] sm:$0xff]
        %v508 = vld [vmem:[%s279 + $0x708] sm:$0xff]
        %v509 = vld [vmem:[%s279 + $0x710] sm:$0xff]
        %v510 = vld [vmem:[%s279 + $0x718] sm:$0xff]
        %v511 = vld [vmem:[%s279 + $0x720] sm:$0xff]
        %v512 = vld [vmem:[%s279 + $0x728] sm:$0xff]
        %v513 = vld [vmem:[%s279 + $0x730] sm:$0xff]
        %v514 = vld [vmem:[%s279 + $0x738] sm:$0xff]
        %v515 = vld [vmem:[%s279 + $0x740] sm:$0xff]
        %v516 = vld [vmem:[%s279 + $0x748] sm:$0xff]
        %v517 = vld [vmem:[%s279 + $0x750] sm:$0xff]
        %v518 = vld [vmem:[%s279 + $0x758] sm:$0xff]
        %v519 = vld [vmem:[%s279 + $0x760] sm:$0xff]
        %v520 = vld [vmem:[%s279 + $0x768] sm:$0xff]
        %v521 = vld [vmem:[%s279 + $0x770] sm:$0xff]
        %v522 = vld [vmem:[%s279 + $0x778] sm:$0xff]
        %v523 = vld [vmem:[%s279 + $0x780] sm:$0xff]
        %v524 = vld [vmem:[%s279 + $0x788] sm:$0xff]
        %v525 = vld [vmem:[%s279 + $0x790] sm:$0xff]
        %v526 = vld [vmem:[%s279 + $0x798] sm:$0xff]
        %v527 = vld [vmem:[%s279 + $0x7a0] sm:$0xff]
        %v528 = vld [vmem:[%s279 + $0x7a8] sm:$0xff]
        %v529 = vld [vmem:[%s279 + $0x7b0] sm:$0xff]
        %v530 = vld [vmem:[%s279 + $0x7b8] sm:$0xff]
        %v531 = vld [vmem:[%s279 + $0x7c0] sm:$0xff]
        %v532 = vld [vmem:[%s279 + $0x7c8] sm:$0xff]
        %v533 = vld [vmem:[%s279 + $0x7d0] sm:$0xff]
        %v534 = vld [vmem:[%s279 + $0x7d8] sm:$0xff]
        %v535 = vld [vmem:[%s279 + $0x7e0] sm:$0xff]
        %v536 = vld [vmem:[%s279 + $0x7e8] sm:$0xff]
        %v537 = vld [vmem:[%s279 + $0x7f0] sm:$0xff]
        %v538 = vld [vmem:[%s279 + $0x7f8] sm:$0xff]
        %v539 = vpack.c.bf16 %v284, %v283
        %v540 = vpack.c.bf16 %v286, %v285
        %v541 = vpack.c.bf16 %v288, %v287
        %v542 = vpack.c.bf16 %v290, %v289
        %v543 = vpack.c.bf16 %v292, %v291
        %v544 = vpack.c.bf16 %v294, %v293
        %v545 = vpack.c.bf16 %v296, %v295
        %v546 = vpack.c.bf16 %v298, %v297
        %v547 = vpack.c.bf16 %v300, %v299
        %v548 = vpack.c.bf16 %v302, %v301
        %v549 = vpack.c.bf16 %v304, %v303
        %v550 = vpack.c.bf16 %v306, %v305
        %v551 = vpack.c.bf16 %v308, %v307
        %v552 = vpack.c.bf16 %v310, %v309
        %v553 = vpack.c.bf16 %v312, %v311
        %v554 = vpack.c.bf16 %v314, %v313
        %v555 = vpack.c.bf16 %v316, %v315
        %v556 = vpack.c.bf16 %v318, %v317
        %v557 = vpack.c.bf16 %v320, %v319
        %v558 = vpack.c.bf16 %v322, %v321
        %v559 = vpack.c.bf16 %v324, %v323
        %v560 = vpack.c.bf16 %v326, %v325
        %v561 = vpack.c.bf16 %v328, %v327
        %v562 = vpack.c.bf16 %v330, %v329
        %v563 = vpack.c.bf16 %v332, %v331
        %v564 = vpack.c.bf16 %v334, %v333
        %v565 = vpack.c.bf16 %v336, %v335
        %v566 = vpack.c.bf16 %v338, %v337
        %v567 = vpack.c.bf16 %v340, %v339
        %v568 = vpack.c.bf16 %v342, %v341
        %v569 = vpack.c.bf16 %v344, %v343
        %v570 = vpack.c.bf16 %v346, %v345
        %v571 = vpack.c.bf16 %v348, %v347
        %v572 = vpack.c.bf16 %v350, %v349
        %v573 = vpack.c.bf16 %v352, %v351
        %v574 = vpack.c.bf16 %v354, %v353
        %v575 = vpack.c.bf16 %v356, %v355
        %v576 = vpack.c.bf16 %v358, %v357
        %v577 = vpack.c.bf16 %v360, %v359
        %v578 = vpack.c.bf16 %v362, %v361
        %v579 = vpack.c.bf16 %v364, %v363
        %v580 = vpack.c.bf16 %v366, %v365
        %v581 = vpack.c.bf16 %v368, %v367
        %v582 = vpack.c.bf16 %v370, %v369
        %v583 = vpack.c.bf16 %v372, %v371
        %v584 = vpack.c.bf16 %v374, %v373
        %v585 = vpack.c.bf16 %v376, %v375
        %v586 = vpack.c.bf16 %v378, %v377
        %v587 = vpack.c.bf16 %v380, %v379
        %v588 = vpack.c.bf16 %v382, %v381
        %v589 = vpack.c.bf16 %v384, %v383
        %v590 = vpack.c.bf16 %v386, %v385
        %v591 = vpack.c.bf16 %v388, %v387
        %v592 = vpack.c.bf16 %v390, %v389
        %v593 = vpack.c.bf16 %v392, %v391
        %v594 = vpack.c.bf16 %v394, %v393
        %v595 = vpack.c.bf16 %v396, %v395
        %v596 = vpack.c.bf16 %v398, %v397
        %v597 = vpack.c.bf16 %v400, %v399
        %v598 = vpack.c.bf16 %v402, %v401
        %v599 = vpack.c.bf16 %v404, %v403
        %v600 = vpack.c.bf16 %v406, %v405
        %v601 = vpack.c.bf16 %v408, %v407
        %v602 = vpack.c.bf16 %v410, %v409
        %v603 = vpack.c.bf16 %v412, %v411
        %v604 = vpack.c.bf16 %v414, %v413
        %v605 = vpack.c.bf16 %v416, %v415
        %v606 = vpack.c.bf16 %v418, %v417
        %v607 = vpack.c.bf16 %v420, %v419
        %v608 = vpack.c.bf16 %v422, %v421
        %v609 = vpack.c.bf16 %v424, %v423
        %v610 = vpack.c.bf16 %v426, %v425
        %v611 = vpack.c.bf16 %v428, %v427
        %v612 = vpack.c.bf16 %v430, %v429
        %v613 = vpack.c.bf16 %v432, %v431
        %v614 = vpack.c.bf16 %v434, %v433
        %v615 = vpack.c.bf16 %v436, %v435
        %v616 = vpack.c.bf16 %v438, %v437
        %v617 = vpack.c.bf16 %v440, %v439
        %v618 = vpack.c.bf16 %v442, %v441
        %v619 = vpack.c.bf16 %v444, %v443
        %v620 = vpack.c.bf16 %v446, %v445
        %v621 = vpack.c.bf16 %v448, %v447
        %v622 = vpack.c.bf16 %v450, %v449
        %v623 = vpack.c.bf16 %v452, %v451
        %v624 = vpack.c.bf16 %v454, %v453
        %v625 = vpack.c.bf16 %v456, %v455
        %v626 = vpack.c.bf16 %v458, %v457
        %v627 = vpack.c.bf16 %v460, %v459
        %v628 = vpack.c.bf16 %v462, %v461
        %v629 = vpack.c.bf16 %v464, %v463
        %v630 = vpack.c.bf16 %v466, %v465
        %v631 = vpack.c.bf16 %v468, %v467
        %v632 = vpack.c.bf16 %v470, %v469
        %v633 = vpack.c.bf16 %v472, %v471
        %v634 = vpack.c.bf16 %v474, %v473
        %v635 = vpack.c.bf16 %v476, %v475
        %v636 = vpack.c.bf16 %v478, %v477
        %v637 = vpack.c.bf16 %v480, %v479
        %v638 = vpack.c.bf16 %v482, %v481
        %v639 = vpack.c.bf16 %v484, %v483
        %v640 = vpack.c.bf16 %v486, %v485
        %v641 = vpack.c.bf16 %v488, %v487
        %v642 = vpack.c.bf16 %v490, %v489
        %v643 = vpack.c.bf16 %v492, %v491
        %v644 = vpack.c.bf16 %v494, %v493
        %v645 = vpack.c.bf16 %v496, %v495
        %v646 = vpack.c.bf16 %v498, %v497
        %v647 = vpack.c.bf16 %v500, %v499
        %v648 = vpack.c.bf16 %v502, %v501
        %v649 = vpack.c.bf16 %v504, %v503
        %v650 = vpack.c.bf16 %v506, %v505
        %v651 = vpack.c.bf16 %v508, %v507
        %v652 = vpack.c.bf16 %v510, %v509
        %v653 = vpack.c.bf16 %v512, %v511
        %v654 = vpack.c.bf16 %v514, %v513
        %v655 = vpack.c.bf16 %v516, %v515
        %v656 = vpack.c.bf16 %v518, %v517
        %v657 = vpack.c.bf16 %v520, %v519
        %v658 = vpack.c.bf16 %v522, %v521
        %v659 = vpack.c.bf16 %v524, %v523
        %v660 = vpack.c.bf16 %v526, %v525
        %v661 = vpack.c.bf16 %v528, %v527
        %v662 = vpack.c.bf16 %v530, %v529
        %v663 = vpack.c.bf16 %v532, %v531
        %v664 = vpack.c.bf16 %v534, %v533
        %v665 = vpack.c.bf16 %v536, %v535
        %v666 = vpack.c.bf16 %v538, %v537
        %v667 = vld [vmem:[%s1] sm:$0xf]
        %v668 = vld [vmem:[%s1 + $0x4] sm:$0xf]
        %v669 = vld [vmem:[%s1 + $0x8] sm:$0xf]
        %v670 = vld [vmem:[%s1 + $0xc] sm:$0xf]
        %v671 = vld [vmem:[%s2] sm:$0xff]
        %v672 = vld [vmem:[%s2 + $0x8] sm:$0xff]
        %v673 = vld [vmem:[%s2 + $0x10] sm:$0xff]
        %v674 = vld [vmem:[%s2 + $0x18] sm:$0xff]
        %676 = vset.pattern.permute.xlu0 0
        %677 = vperm.xlu0 %676, %v671
        %v678 = vpop.permute.xlu0 %677
        %681 = vset.pattern.permute.xlu0 0
        %682 = vperm.xlu0 %681, %v672
        %v683 = vpop.permute.xlu0 %682
        %686 = vset.pattern.permute.xlu0 0
        %687 = vperm.xlu0 %686, %v673
        %v688 = vpop.permute.xlu0 %687
        %691 = vset.pattern.permute.xlu0 0
        %692 = vperm.xlu0 %691, %v674
        %v693 = vpop.permute.xlu0 %692
        %v699 = vunpack.c.l.b16 %v667
        %v700 = vunpack.c.l.b16 %v668
        %v701 = vunpack.c.l.b16 %v669
        %v702 = vunpack.c.l.b16 %v670
        %v703 = vpack.c.b16 %v700, %v699
        %v704 = vpack.c.b16 %v702, %v701
        %vm705 = vcmask 261120
        %v707 = vsel %vm705, %v703, 0
        %v710 = vsel %vm705, %v704, 0
        %v713 = vsel %vm705, %v539, 0
        %v716 = vsel %vm705, %v540, 0
        %v719 = vsel %vm705, %v541, 0
        %v722 = vsel %vm705, %v542, 0
        %v725 = vsel %vm705, %v543, 0
        %v728 = vsel %vm705, %v544, 0
        %v731 = vsel %vm705, %v545, 0
        %v734 = vsel %vm705, %v546, 0
        %v737 = vsel %vm705, %v547, 0
        %v740 = vsel %vm705, %v548, 0
        %v743 = vsel %vm705, %v549, 0
        %v746 = vsel %vm705, %v550, 0
        %v749 = vsel %vm705, %v551, 0
        %v752 = vsel %vm705, %v552, 0
        %v755 = vsel %vm705, %v553, 0
        %v758 = vsel %vm705, %v554, 0
        %v761 = vsel %vm705, %v555, 0
        %v764 = vsel %vm705, %v556, 0
        %v767 = vsel %vm705, %v557, 0
        %v770 = vsel %vm705, %v558, 0
        %v773 = vsel %vm705, %v559, 0
        %v776 = vsel %vm705, %v560, 0
        %v779 = vsel %vm705, %v561, 0
        %v782 = vsel %vm705, %v562, 0
        %v785 = vsel %vm705, %v563, 0
        %v788 = vsel %vm705, %v564, 0
        %v791 = vsel %vm705, %v565, 0
        %v794 = vsel %vm705, %v566, 0
        %v797 = vsel %vm705, %v567, 0
        %v800 = vsel %vm705, %v568, 0
        %v803 = vsel %vm705, %v569, 0
        %v806 = vsel %vm705, %v570, 0
        %v809 = vsel %vm705, %v571, 0
        %v812 = vsel %vm705, %v572, 0
        %v815 = vsel %vm705, %v573, 0
        %v818 = vsel %vm705, %v574, 0
        %v821 = vsel %vm705, %v575, 0
        %v824 = vsel %vm705, %v576, 0
        %v827 = vsel %vm705, %v577, 0
        %v830 = vsel %vm705, %v578, 0
        %v833 = vsel %vm705, %v579, 0
        %v836 = vsel %vm705, %v580, 0
        %v839 = vsel %vm705, %v581, 0
        %v842 = vsel %vm705, %v582, 0
        %v845 = vsel %vm705, %v583, 0
        %v848 = vsel %vm705, %v584, 0
        %v851 = vsel %vm705, %v585, 0
        %v854 = vsel %vm705, %v586, 0
        %v857 = vsel %vm705, %v587, 0
        %v860 = vsel %vm705, %v588, 0
        %v863 = vsel %vm705, %v589, 0
        %v866 = vsel %vm705, %v590, 0
        %v869 = vsel %vm705, %v591, 0
        %v872 = vsel %vm705, %v592, 0
        %v875 = vsel %vm705, %v593, 0
        %v878 = vsel %vm705, %v594, 0
        %v881 = vsel %vm705, %v595, 0
        %v884 = vsel %vm705, %v596, 0
        %v887 = vsel %vm705, %v597, 0
        %v890 = vsel %vm705, %v598, 0
        %v893 = vsel %vm705, %v599, 0
        %v896 = vsel %vm705, %v600, 0
        %v899 = vsel %vm705, %v601, 0
        %v902 = vsel %vm705, %v602, 0
        %v905 = vsel %vm705, %v603, 0
        %v908 = vsel %vm705, %v604, 0
        %v911 = vsel %vm705, %v605, 0
        %v914 = vsel %vm705, %v606, 0
        %v917 = vsel %vm705, %v607, 0
        %v920 = vsel %vm705, %v608, 0
        %v923 = vsel %vm705, %v609, 0
        %v926 = vsel %vm705, %v610, 0
        %v929 = vsel %vm705, %v611, 0
        %v932 = vsel %vm705, %v612, 0
        %v935 = vsel %vm705, %v613, 0
        %v938 = vsel %vm705, %v614, 0
        %v941 = vsel %vm705, %v615, 0
        %v944 = vsel %vm705, %v616, 0
        %v947 = vsel %vm705, %v617, 0
        %v950 = vsel %vm705, %v618, 0
        %v953 = vsel %vm705, %v619, 0
        %v956 = vsel %vm705, %v620, 0
        %v959 = vsel %vm705, %v621, 0
        %v962 = vsel %vm705, %v622, 0
        %v965 = vsel %vm705, %v623, 0
        %v968 = vsel %vm705, %v624, 0
        %v971 = vsel %vm705, %v625, 0
        %v974 = vsel %vm705, %v626, 0
        %v977 = vsel %vm705, %v627, 0
        %v980 = vsel %vm705, %v628, 0
        %v983 = vsel %vm705, %v629, 0
        %v986 = vsel %vm705, %v630, 0
        %v989 = vsel %vm705, %v631, 0
        %v992 = vsel %vm705, %v632, 0
        %v995 = vsel %vm705, %v633, 0
        %v998 = vsel %vm705, %v634, 0
        %v1001 = vsel %vm705, %v635, 0
        %v1004 = vsel %vm705, %v636, 0
        %v1007 = vsel %vm705, %v637, 0
        %v1010 = vsel %vm705, %v638, 0
        %v1013 = vsel %vm705, %v639, 0
        %v1016 = vsel %vm705, %v640, 0
        %v1019 = vsel %vm705, %v641, 0
        %v1022 = vsel %vm705, %v642, 0
        %v1025 = vsel %vm705, %v643, 0
        %v1028 = vsel %vm705, %v644, 0
        %v1031 = vsel %vm705, %v645, 0
        %v1034 = vsel %vm705, %v646, 0
        %v1037 = vsel %vm705, %v647, 0
        %v1040 = vsel %vm705, %v648, 0
        %v1043 = vsel %vm705, %v649, 0
        %v1046 = vsel %vm705, %v650, 0
        %v1049 = vsel %vm705, %v651, 0
        %v1052 = vsel %vm705, %v652, 0
        %v1055 = vsel %vm705, %v653, 0
        %v1058 = vsel %vm705, %v654, 0
        %v1061 = vsel %vm705, %v655, 0
        %v1064 = vsel %vm705, %v656, 0
        %v1067 = vsel %vm705, %v657, 0
        %v1070 = vsel %vm705, %v658, 0
        %v1073 = vsel %vm705, %v659, 0
        %v1076 = vsel %vm705, %v660, 0
        %v1079 = vsel %vm705, %v661, 0
        %v1082 = vsel %vm705, %v662, 0
        %v1085 = vsel %vm705, %v663, 0
        %v1088 = vsel %vm705, %v664, 0
        %v1091 = vsel %vm705, %v665, 0
        %v1094 = vsel %vm705, %v666, 0
        %1096 = vmatprep.subr.bf16.mxu0 0
        %1097 = vmatpush1.bf16.xpose.msra.mxu0 %v713
        %1098 = vmatprep.subr.bf16.mxu0 0
        %1099 = vmatpush1.bf16.xpose.msra.mxu0 %v716
        %1100 = vmatprep.subr.bf16.mxu0 0
        %1101 = vmatpush1.bf16.xpose.msra.mxu0 %v719
        %1102 = vmatprep.subr.bf16.mxu0 0
        %1103 = vmatpush1.bf16.xpose.msra.mxu0 %v722
        %1104 = vmatprep.subr.bf16.mxu0 0
        %1105 = vmatpush1.bf16.xpose.msra.mxu0 %v725
        %1106 = vmatprep.subr.bf16.mxu0 0
        %1107 = vmatpush1.bf16.xpose.msra.mxu0 %v728
        %1108 = vmatprep.subr.bf16.mxu0 0
        %1109 = vmatpush1.bf16.xpose.msra.mxu0 %v731
        %1110 = vmatprep.subr.bf16.mxu0 0
        %1111 = vmatpush1.bf16.xpose.msra.mxu0 %v734
        %1112 = vmatprep.subr.bf16.mxu0 0
        %1113 = vmatpush1.bf16.xpose.msra.mxu0 %v737
        %1114 = vmatprep.subr.bf16.mxu0 0
        %1115 = vmatpush1.bf16.xpose.msra.mxu0 %v740
        %1116 = vmatprep.subr.bf16.mxu0 0
        %1117 = vmatpush1.bf16.xpose.msra.mxu0 %v743
        %1118 = vmatprep.subr.bf16.mxu0 0
        %1119 = vmatpush1.bf16.xpose.msra.mxu0 %v746
        %1120 = vmatprep.subr.bf16.mxu0 0
        %1121 = vmatpush1.bf16.xpose.msra.mxu0 %v749
        %1122 = vmatprep.subr.bf16.mxu0 0
        %1123 = vmatpush1.bf16.xpose.msra.mxu0 %v752
        %1124 = vmatprep.subr.bf16.mxu0 0
        %1125 = vmatpush1.bf16.xpose.msra.mxu0 %v755
        %1126 = vmatprep.subr.bf16.mxu0 0
        %1127 = vmatpush1.bf16.xpose.msra.mxu0 %v758
        %1128 = vmatprep.mubr.bf16.mxu0 0
        %1129 = vmatmul.mubr.bf16.gmra.mrb[0].mxu0 %v707
        %v1130 = vpop.f32.mrb[0].mxu0
        %v1131 = vadd.f32 %v678, %v1130
        %v1132 = vpop.f32.mrb[0].mxu0
        %v1133 = vadd.f32 %v678, %v1132
        %v1134 = vpop.f32.mrb[0].mxu0
        %v1135 = vadd.f32 %v683, %v1134
        %v1136 = vpop.f32.mrb[0].mxu0
        %v1137 = vadd.f32 %v683, %v1136
        %1138 = vmatprep.mubr.bf16.mxu0 0
        %1139 = vmatmul.mubr.bf16.gmra.mrb[0].mxu0 %v710
        %v1140 = vpop.f32.mrb[0].mxu0
        %v1141 = vadd.f32 %v688, %v1140
        %v1142 = vpop.f32.mrb[0].mxu0
        %v1143 = vadd.f32 %v688, %v1142
        %v1144 = vpop.f32.mrb[0].mxu0
        %v1145 = vadd.f32 %v693, %v1144
        %v1146 = vpop.f32.mrb[0].mxu0
        %v1147 = vadd.f32 %v693, %v1146
        %1148 = vdwg.mxu0
        %1149 = vmatprep.subr.bf16.mxu0 0
        %1150 = vmatpush1.bf16.xpose.msra.mxu0 %v761
        %1151 = vmatprep.subr.bf16.mxu0 0
        %1152 = vmatpush1.bf16.xpose.msra.mxu0 %v764
        %1153 = vmatprep.subr.bf16.mxu0 0
        %1154 = vmatpush1.bf16.xpose.msra.mxu0 %v767
        %1155 = vmatprep.subr.bf16.mxu0 0
        %1156 = vmatpush1.bf16.xpose.msra.mxu0 %v770
        %1157 = vmatprep.subr.bf16.mxu0 0
        %1158 = vmatpush1.bf16.xpose.msra.mxu0 %v773
        %1159 = vmatprep.subr.bf16.mxu0 0
        %1160 = vmatpush1.bf16.xpose.msra.mxu0 %v776
        %1161 = vmatprep.subr.bf16.mxu0 0
        %1162 = vmatpush1.bf16.xpose.msra.mxu0 %v779
        %1163 = vmatprep.subr.bf16.mxu0 0
        %1164 = vmatpush1.bf16.xpose.msra.mxu0 %v782
        %1165 = vmatprep.subr.bf16.mxu0 0
        %1166 = vmatpush1.bf16.xpose.msra.mxu0 %v785
        %1167 = vmatprep.subr.bf16.mxu0 0
        %1168 = vmatpush1.bf16.xpose.msra.mxu0 %v788
        %1169 = vmatprep.subr.bf16.mxu0 0
        %1170 = vmatpush1.bf16.xpose.msra.mxu0 %v791
        %1171 = vmatprep.subr.bf16.mxu0 0
        %1172 = vmatpush1.bf16.xpose.msra.mxu0 %v794
        %1173 = vmatprep.subr.bf16.mxu0 0
        %1174 = vmatpush1.bf16.xpose.msra.mxu0 %v797
        %1175 = vmatprep.subr.bf16.mxu0 0
        %1176 = vmatpush1.bf16.xpose.msra.mxu0 %v800
        %1177 = vmatprep.subr.bf16.mxu0 0
        %1178 = vmatpush1.bf16.xpose.msra.mxu0 %v803
        %1179 = vmatprep.subr.bf16.mxu0 0
        %1180 = vmatpush1.bf16.xpose.msra.mxu0 %v806
        %1181 = vmatprep.mubr.bf16.mxu0 0
        %1182 = vmatmul.mubr.bf16.gmra.mrb[0].mxu0 %v707
        %v1183 = vpop.f32.mrb[0].mxu0
        %v1184 = vadd.f32 %v678, %v1183
        %v1185 = vpop.f32.mrb[0].mxu0
        %v1186 = vadd.f32 %v678, %v1185
        %v1187 = vpop.f32.mrb[0].mxu0
        %v1188 = vadd.f32 %v683, %v1187
        %v1189 = vpop.f32.mrb[0].mxu0
        %v1190 = vadd.f32 %v683, %v1189
        %1191 = vmatprep.mubr.bf16.mxu0 0
        %1192 = vmatmul.mubr.bf16.gmra.mrb[0].mxu0 %v710
        %v1193 = vpop.f32.mrb[0].mxu0
        %v1194 = vadd.f32 %v688, %v1193
        %v1195 = vpop.f32.mrb[0].mxu0
        %v1196 = vadd.f32 %v688, %v1195
        %v1197 = vpop.f32.mrb[0].mxu0
        %v1198 = vadd.f32 %v693, %v1197
        %v1199 = vpop.f32.mrb[0].mxu0
        %v1200 = vadd.f32 %v693, %v1199
        %1201 = vdwg.mxu0
        %1202 = vmatprep.subr.bf16.mxu0 0
        %1203 = vmatpush1.bf16.xpose.msra.mxu0 %v809
        %1204 = vmatprep.subr.bf16.mxu0 0
        %1205 = vmatpush1.bf16.xpose.msra.mxu0 %v812
        %1206 = vmatprep.subr.bf16.mxu0 0
        %1207 = vmatpush1.bf16.xpose.msra.mxu0 %v815
        %1208 = vmatprep.subr.bf16.mxu0 0
        %1209 = vmatpush1.bf16.xpose.msra.mxu0 %v818
        %1210 = vmatprep.subr.bf16.mxu0 0
        %1211 = vmatpush1.bf16.xpose.msra.mxu0 %v821
        %1212 = vmatprep.subr.bf16.mxu0 0
        %1213 = vmatpush1.bf16.xpose.msra.mxu0 %v824
        %1214 = vmatprep.subr.bf16.mxu0 0
        %1215 = vmatpush1.bf16.xpose.msra.mxu0 %v827
        %1216 = vmatprep.subr.bf16.mxu0 0
        %1217 = vmatpush1.bf16.xpose.msra.mxu0 %v830
        %1218 = vmatprep.subr.bf16.mxu0 0
        %1219 = vmatpush1.bf16.xpose.msra.mxu0 %v833
        %1220 = vmatprep.subr.bf16.mxu0 0
        %1221 = vmatpush1.bf16.xpose.msra.mxu0 %v836
        %1222 = vmatprep.subr.bf16.mxu0 0
        %1223 = vmatpush1.bf16.xpose.msra.mxu0 %v839
        %1224 = vmatprep.subr.bf16.mxu0 0
        %1225 = vmatpush1.bf16.xpose.msra.mxu0 %v842
        %1226 = vmatprep.subr.bf16.mxu0 0
        %1227 = vmatpush1.bf16.xpose.msra.mxu0 %v845
        %1228 = vmatprep.subr.bf16.mxu0 0
        %1229 = vmatpush1.bf16.xpose.msra.mxu0 %v848
        %1230 = vmatprep.subr.bf16.mxu0 0
        %1231 = vmatpush1.bf16.xpose.msra.mxu0 %v851
        %1232 = vmatprep.subr.bf16.mxu0 0
        %1233 = vmatpush1.bf16.xpose.msra.mxu0 %v854
        %1234 = vmatprep.mubr.bf16.mxu0 0
        %1235 = vmatmul.mubr.bf16.gmra.mrb[0].mxu0 %v707
        %v1236 = vpop.f32.mrb[0].mxu0
        %v1237 = vadd.f32 %v678, %v1236
        %v1238 = vpop.f32.mrb[0].mxu0
        %v1239 = vadd.f32 %v678, %v1238
        %v1240 = vpop.f32.mrb[0].mxu0
        %v1241 = vadd.f32 %v683, %v1240
        %v1242 = vpop.f32.mrb[0].mxu0
        %v1243 = vadd.f32 %v683, %v1242
        %1244 = vmatprep.mubr.bf16.mxu0 0
        %1245 = vmatmul.mubr.bf16.gmra.mrb[0].mxu0 %v710
        %v1246 = vpop.f32.mrb[0].mxu0
        %v1247 = vadd.f32 %v688, %v1246
        %v1248 = vpop.f32.mrb[0].mxu0
        %v1249 = vadd.f32 %v688, %v1248
        %v1250 = vpop.f32.mrb[0].mxu0
        %v1251 = vadd.f32 %v693, %v1250
        %v1252 = vpop.f32.mrb[0].mxu0
        %v1253 = vadd.f32 %v693, %v1252
        %1254 = vdwg.mxu0
        %1255 = vmatprep.subr.bf16.mxu0 0
        %1256 = vmatpush1.bf16.xpose.msra.mxu0 %v857
        %1257 = vmatprep.subr.bf16.mxu0 0
        %1258 = vmatpush1.bf16.xpose.msra.mxu0 %v860
        %1259 = vmatprep.subr.bf16.mxu0 0
        %1260 = vmatpush1.bf16.xpose.msra.mxu0 %v863
        %1261 = vmatprep.subr.bf16.mxu0 0
        %1262 = vmatpush1.bf16.xpose.msra.mxu0 %v866
        %1263 = vmatprep.subr.bf16.mxu0 0
        %1264 = vmatpush1.bf16.xpose.msra.mxu0 %v869
        %1265 = vmatprep.subr.bf16.mxu0 0
        %1266 = vmatpush1.bf16.xpose.msra.mxu0 %v872
        %1267 = vmatprep.subr.bf16.mxu0 0
        %1268 = vmatpush1.bf16.xpose.msra.mxu0 %v875
        %1269 = vmatprep.subr.bf16.mxu0 0
        %1270 = vmatpush1.bf16.xpose.msra.mxu0 %v878
        %1271 = vmatprep.subr.bf16.mxu0 0
        %1272 = vmatpush1.bf16.xpose.msra.mxu0 %v881
        %1273 = vmatprep.subr.bf16.mxu0 0
        %1274 = vmatpush1.bf16.xpose.msra.mxu0 %v884
        %1275 = vmatprep.subr.bf16.mxu0 0
        %1276 = vmatpush1.bf16.xpose.msra.mxu0 %v887
        %1277 = vmatprep.subr.bf16.mxu0 0
        %1278 = vmatpush1.bf16.xpose.msra.mxu0 %v890
        %1279 = vmatprep.subr.bf16.mxu0 0
        %1280 = vmatpush1.bf16.xpose.msra.mxu0 %v893
        %1281 = vmatprep.subr.bf16.mxu0 0
        %1282 = vmatpush1.bf16.xpose.msra.mxu0 %v896
        %1283 = vmatprep.subr.bf16.mxu0 0
        %1284 = vmatpush1.bf16.xpose.msra.mxu0 %v899
        %1285 = vmatprep.subr.bf16.mxu0 0
        %1286 = vmatpush1.bf16.xpose.msra.mxu0 %v902
        %1287 = vmatprep.mubr.bf16.mxu0 0
        %1288 = vmatmul.mubr.bf16.gmra.mrb[0].mxu0 %v707
        %v1289 = vpop.f32.mrb[0].mxu0
        %v1290 = vadd.f32 %v678, %v1289
        %v1291 = vpop.f32.mrb[0].mxu0
        %v1292 = vadd.f32 %v678, %v1291
        %v1293 = vpop.f32.mrb[0].mxu0
        %v1294 = vadd.f32 %v683, %v1293
        %v1295 = vpop.f32.mrb[0].mxu0
        %v1296 = vadd.f32 %v683, %v1295
        %1297 = vmatprep.mubr.bf16.mxu0 0
        %1298 = vmatmul.mubr.bf16.gmra.mrb[0].mxu0 %v710
        %v1299 = vpop.f32.mrb[0].mxu0
        %v1300 = vadd.f32 %v688, %v1299
        %v1301 = vpop.f32.mrb[0].mxu0
        %v1302 = vadd.f32 %v688, %v1301
        %v1303 = vpop.f32.mrb[0].mxu0
        %v1304 = vadd.f32 %v693, %v1303
        %v1305 = vpop.f32.mrb[0].mxu0
        %v1306 = vadd.f32 %v693, %v1305
        %1307 = vdwg.mxu0
        %1308 = vmatprep.subr.bf16.mxu0 0
        %1309 = vmatpush1.bf16.xpose.msra.mxu0 %v905
        %1310 = vmatprep.subr.bf16.mxu0 0
        %1311 = vmatpush1.bf16.xpose.msra.mxu0 %v908
        %1312 = vmatprep.subr.bf16.mxu0 0
        %1313 = vmatpush1.bf16.xpose.msra.mxu0 %v911
        %1314 = vmatprep.subr.bf16.mxu0 0
        %1315 = vmatpush1.bf16.xpose.msra.mxu0 %v914
        %1316 = vmatprep.subr.bf16.mxu0 0
        %1317 = vmatpush1.bf16.xpose.msra.mxu0 %v917
        %1318 = vmatprep.subr.bf16.mxu0 0
        %1319 = vmatpush1.bf16.xpose.msra.mxu0 %v920
        %1320 = vmatprep.subr.bf16.mxu0 0
        %1321 = vmatpush1.bf16.xpose.msra.mxu0 %v923
        %1322 = vmatprep.subr.bf16.mxu0 0
        %1323 = vmatpush1.bf16.xpose.msra.mxu0 %v926
        %1324 = vmatprep.subr.bf16.mxu0 0
        %1325 = vmatpush1.bf16.xpose.msra.mxu0 %v929
        %1326 = vmatprep.subr.bf16.mxu0 0
        %1327 = vmatpush1.bf16.xpose.msra.mxu0 %v932
        %1328 = vmatprep.subr.bf16.mxu0 0
        %1329 = vmatpush1.bf16.xpose.msra.mxu0 %v935
        %1330 = vmatprep.subr.bf16.mxu0 0
        %1331 = vmatpush1.bf16.xpose.msra.mxu0 %v938
        %1332 = vmatprep.subr.bf16.mxu0 0
        %1333 = vmatpush1.bf16.xpose.msra.mxu0 %v941
        %1334 = vmatprep.subr.bf16.mxu0 0
        %1335 = vmatpush1.bf16.xpose.msra.mxu0 %v944
        %1336 = vmatprep.subr.bf16.mxu0 0
        %1337 = vmatpush1.bf16.xpose.msra.mxu0 %v947
        %1338 = vmatprep.subr.bf16.mxu0 0
        %1339 = vmatpush1.bf16.xpose.msra.mxu0 %v950
        %1340 = vmatprep.mubr.bf16.mxu0 0
        %1341 = vmatmul.mubr.bf16.gmra.mrb[0].mxu0 %v707
        %v1342 = vpop.f32.mrb[0].mxu0
        %v1343 = vadd.f32 %v678, %v1342
        %v1344 = vpop.f32.mrb[0].mxu0
        %v1345 = vadd.f32 %v678, %v1344
        %v1346 = vpop.f32.mrb[0].mxu0
        %v1347 = vadd.f32 %v683, %v1346
        %v1348 = vpop.f32.mrb[0].mxu0
        %v1349 = vadd.f32 %v683, %v1348
        %1350 = vmatprep.mubr.bf16.mxu0 0
        %1351 = vmatmul.mubr.bf16.gmra.mrb[0].mxu0 %v710
        %v1352 = vpop.f32.mrb[0].mxu0
        %v1353 = vadd.f32 %v688, %v1352
        %v1354 = vpop.f32.mrb[0].mxu0
        %v1355 = vadd.f32 %v688, %v1354
        %v1356 = vpop.f32.mrb[0].mxu0
        %v1357 = vadd.f32 %v693, %v1356
        %v1358 = vpop.f32.mrb[0].mxu0
        %v1359 = vadd.f32 %v693, %v1358
        %1360 = vdwg.mxu0
        %1361 = vmatprep.subr.bf16.mxu0 0
        %1362 = vmatpush1.bf16.xpose.msra.mxu0 %v953
        %1363 = vmatprep.subr.bf16.mxu0 0
        %1364 = vmatpush1.bf16.xpose.msra.mxu0 %v956
        %1365 = vmatprep.subr.bf16.mxu0 0
        %1366 = vmatpush1.bf16.xpose.msra.mxu0 %v959
        %1367 = vmatprep.subr.bf16.mxu0 0
        %1368 = vmatpush1.bf16.xpose.msra.mxu0 %v962
        %1369 = vmatprep.subr.bf16.mxu0 0
        %1370 = vmatpush1.bf16.xpose.msra.mxu0 %v965
        %1371 = vmatprep.subr.bf16.mxu0 0
        %1372 = vmatpush1.bf16.xpose.msra.mxu0 %v968
        %1373 = vmatprep.subr.bf16.mxu0 0
        %1374 = vmatpush1.bf16.xpose.msra.mxu0 %v971
        %1375 = vmatprep.subr.bf16.mxu0 0
        %1376 = vmatpush1.bf16.xpose.msra.mxu0 %v974
        %1377 = vmatprep.subr.bf16.mxu0 0
        %1378 = vmatpush1.bf16.xpose.msra.mxu0 %v977
        %1379 = vmatprep.subr.bf16.mxu0 0
        %1380 = vmatpush1.bf16.xpose.msra.mxu0 %v980
        %1381 = vmatprep.subr.bf16.mxu0 0
        %1382 = vmatpush1.bf16.xpose.msra.mxu0 %v983
        %1383 = vmatprep.subr.bf16.mxu0 0
        %1384 = vmatpush1.bf16.xpose.msra.mxu0 %v986
        %1385 = vmatprep.subr.bf16.mxu0 0
        %1386 = vmatpush1.bf16.xpose.msra.mxu0 %v989
        %1387 = vmatprep.subr.bf16.mxu0 0
        %1388 = vmatpush1.bf16.xpose.msra.mxu0 %v992
        %1389 = vmatprep.subr.bf16.mxu0 0
        %1390 = vmatpush1.bf16.xpose.msra.mxu0 %v995
        %1391 = vmatprep.subr.bf16.mxu0 0
        %1392 = vmatpush1.bf16.xpose.msra.mxu0 %v998
        %1393 = vmatprep.mubr.bf16.mxu0 0
        %1394 = vmatmul.mubr.bf16.gmra.mrb[0].mxu0 %v707
        %v1395 = vpop.f32.mrb[0].mxu0
        %v1396 = vadd.f32 %v678, %v1395
        %v1397 = vpop.f32.mrb[0].mxu0
        %v1398 = vadd.f32 %v678, %v1397
        %v1399 = vpop.f32.mrb[0].mxu0
        %v1400 = vadd.f32 %v683, %v1399
        %v1401 = vpop.f32.mrb[0].mxu0
        %v1402 = vadd.f32 %v683, %v1401
        %1403 = vmatprep.mubr.bf16.mxu0 0
        %1404 = vmatmul.mubr.bf16.gmra.mrb[0].mxu0 %v710
        %v1405 = vpop.f32.mrb[0].mxu0
        %v1406 = vadd.f32 %v688, %v1405
        %v1407 = vpop.f32.mrb[0].mxu0
        %v1408 = vadd.f32 %v688, %v1407
        %v1409 = vpop.f32.mrb[0].mxu0
        %v1410 = vadd.f32 %v693, %v1409
        %v1411 = vpop.f32.mrb[0].mxu0
        %v1412 = vadd.f32 %v693, %v1411
        %1413 = vdwg.mxu0
        %1414 = vmatprep.subr.bf16.mxu0 0
        %1415 = vmatpush1.bf16.xpose.msra.mxu0 %v1001
        %1416 = vmatprep.subr.bf16.mxu0 0
        %1417 = vmatpush1.bf16.xpose.msra.mxu0 %v1004
        %1418 = vmatprep.subr.bf16.mxu0 0
        %1419 = vmatpush1.bf16.xpose.msra.mxu0 %v1007
        %1420 = vmatprep.subr.bf16.mxu0 0
        %1421 = vmatpush1.bf16.xpose.msra.mxu0 %v1010
        %1422 = vmatprep.subr.bf16.mxu0 0
        %1423 = vmatpush1.bf16.xpose.msra.mxu0 %v1013
        %1424 = vmatprep.subr.bf16.mxu0 0
        %1425 = vmatpush1.bf16.xpose.msra.mxu0 %v1016
        %1426 = vmatprep.subr.bf16.mxu0 0
        %1427 = vmatpush1.bf16.xpose.msra.mxu0 %v1019
        %1428 = vmatprep.subr.bf16.mxu0 0
        %1429 = vmatpush1.bf16.xpose.msra.mxu0 %v1022
        %1430 = vmatprep.subr.bf16.mxu0 0
        %1431 = vmatpush1.bf16.xpose.msra.mxu0 %v1025
        %1432 = vmatprep.subr.bf16.mxu0 0
        %1433 = vmatpush1.bf16.xpose.msra.mxu0 %v1028
        %1434 = vmatprep.subr.bf16.mxu0 0
        %1435 = vmatpush1.bf16.xpose.msra.mxu0 %v1031
        %1436 = vmatprep.subr.bf16.mxu0 0
        %1437 = vmatpush1.bf16.xpose.msra.mxu0 %v1034
        %1438 = vmatprep.subr.bf16.mxu0 0
        %1439 = vmatpush1.bf16.xpose.msra.mxu0 %v1037
        %1440 = vmatprep.subr.bf16.mxu0 0
        %1441 = vmatpush1.bf16.xpose.msra.mxu0 %v1040
        %1442 = vmatprep.subr.bf16.mxu0 0
        %1443 = vmatpush1.bf16.xpose.msra.mxu0 %v1043
        %1444 = vmatprep.subr.bf16.mxu0 0
        %1445 = vmatpush1.bf16.xpose.msra.mxu0 %v1046
        %1446 = vmatprep.mubr.bf16.mxu0 0
        %1447 = vmatmul.mubr.bf16.gmra.mrb[0].mxu0 %v707
        %v1448 = vpop.f32.mrb[0].mxu0
        %v1449 = vadd.f32 %v678, %v1448
        %v1450 = vpop.f32.mrb[0].mxu0
        %v1451 = vadd.f32 %v678, %v1450
        %v1452 = vpop.f32.mrb[0].mxu0
        %v1453 = vadd.f32 %v683, %v1452
        %v1454 = vpop.f32.mrb[0].mxu0
        %v1455 = vadd.f32 %v683, %v1454
        %1456 = vmatprep.mubr.bf16.mxu0 0
        %1457 = vmatmul.mubr.bf16.gmra.mrb[0].mxu0 %v710
        %v1458 = vpop.f32.mrb[0].mxu0
        %v1459 = vadd.f32 %v688, %v1458
        %v1460 = vpop.f32.mrb[0].mxu0
        %v1461 = vadd.f32 %v688, %v1460
        %v1462 = vpop.f32.mrb[0].mxu0
        %v1463 = vadd.f32 %v693, %v1462
        %v1464 = vpop.f32.mrb[0].mxu0
        %v1465 = vadd.f32 %v693, %v1464
        %1466 = vdwg.mxu0
        %1467 = vmatprep.subr.bf16.mxu0 0
        %1468 = vmatpush1.bf16.xpose.msra.mxu0 %v1049
        %1469 = vmatprep.subr.bf16.mxu0 0
        %1470 = vmatpush1.bf16.xpose.msra.mxu0 %v1052
        %1471 = vmatprep.subr.bf16.mxu0 0
        %1472 = vmatpush1.bf16.xpose.msra.mxu0 %v1055
        %1473 = vmatprep.subr.bf16.mxu0 0
        %1474 = vmatpush1.bf16.xpose.msra.mxu0 %v1058
        %1475 = vmatprep.subr.bf16.mxu0 0
        %1476 = vmatpush1.bf16.xpose.msra.mxu0 %v1061
        %1477 = vmatprep.subr.bf16.mxu0 0
        %1478 = vmatpush1.bf16.xpose.msra.mxu0 %v1064
        %1479 = vmatprep.subr.bf16.mxu0 0
        %1480 = vmatpush1.bf16.xpose.msra.mxu0 %v1067
        %1481 = vmatprep.subr.bf16.mxu0 0
        %1482 = vmatpush1.bf16.xpose.msra.mxu0 %v1070
        %1483 = vmatprep.subr.bf16.mxu0 0
        %1484 = vmatpush1.bf16.xpose.msra.mxu0 %v1073
        %1485 = vmatprep.subr.bf16.mxu0 0
        %1486 = vmatpush1.bf16.xpose.msra.mxu0 %v1076
        %1487 = vmatprep.subr.bf16.mxu0 0
        %1488 = vmatpush1.bf16.xpose.msra.mxu0 %v1079
        %1489 = vmatprep.subr.bf16.mxu0 0
        %1490 = vmatpush1.bf16.xpose.msra.mxu0 %v1082
        %1491 = vmatprep.subr.bf16.mxu0 0
        %1492 = vmatpush1.bf16.xpose.msra.mxu0 %v1085
        %1493 = vmatprep.subr.bf16.mxu0 0
        %1494 = vmatpush1.bf16.xpose.msra.mxu0 %v1088
        %1495 = vmatprep.subr.bf16.mxu0 0
        %1496 = vmatpush1.bf16.xpose.msra.mxu0 %v1091
        %1497 = vmatprep.subr.bf16.mxu0 0
        %1498 = vmatpush1.bf16.xpose.msra.mxu0 %v1094
        %1499 = vmatprep.mubr.bf16.mxu0 0
        %1500 = vmatmul.mubr.bf16.gmra.mrb[0].mxu0 %v707
        %v1501 = vpop.f32.mrb[0].mxu0
        %v1502 = vadd.f32 %v678, %v1501
        %v1503 = vpop.f32.mrb[0].mxu0
        %v1504 = vadd.f32 %v678, %v1503
        %v1505 = vpop.f32.mrb[0].mxu0
        %v1506 = vadd.f32 %v683, %v1505
        %v1507 = vpop.f32.mrb[0].mxu0
        %v1508 = vadd.f32 %v683, %v1507
        %1509 = vmatprep.mubr.bf16.mxu0 0
        %1510 = vmatmul.mubr.bf16.gmra.mrb[0].mxu0 %v710
        %v1511 = vpop.f32.mrb[0].mxu0
        %v1512 = vadd.f32 %v688, %v1511
        %v1513 = vpop.f32.mrb[0].mxu0
        %v1514 = vadd.f32 %v688, %v1513
        %v1515 = vpop.f32.mrb[0].mxu0
        %v1516 = vadd.f32 %v693, %v1515
        %v1517 = vpop.f32.mrb[0].mxu0
        %v1518 = vadd.f32 %v693, %v1517
        %1519 = vdwg.mxu0
        %v1520 = vmax.f32 %v1131, 0.0
        %v1521 = vmax.f32 %v1133, 0.0
        %v1522 = vmax.f32 %v1184, 0.0
        %v1523 = vmax.f32 %v1186, 0.0
        %v1524 = vmax.f32 %v1237, 0.0
        %v1525 = vmax.f32 %v1239, 0.0
        %v1526 = vmax.f32 %v1290, 0.0
        %v1527 = vmax.f32 %v1292, 0.0
        %v1528 = vmax.f32 %v1343, 0.0
        %v1529 = vmax.f32 %v1345, 0.0
        %v1530 = vmax.f32 %v1396, 0.0
        %v1531 = vmax.f32 %v1398, 0.0
        %v1532 = vmax.f32 %v1449, 0.0
        %v1533 = vmax.f32 %v1451, 0.0
        %v1534 = vmax.f32 %v1502, 0.0
        %v1535 = vmax.f32 %v1504, 0.0
        %v1536 = vmax.f32 %v1135, 0.0
        %v1537 = vmax.f32 %v1137, 0.0
        %v1538 = vmax.f32 %v1188, 0.0
        %v1539 = vmax.f32 %v1190, 0.0
        %v1540 = vmax.f32 %v1241, 0.0
        %v1541 = vmax.f32 %v1243, 0.0
        %v1542 = vmax.f32 %v1294, 0.0
        %v1543 = vmax.f32 %v1296, 0.0
        %v1544 = vmax.f32 %v1347, 0.0
        %v1545 = vmax.f32 %v1349, 0.0
        %v1546 = vmax.f32 %v1400, 0.0
        %v1547 = vmax.f32 %v1402, 0.0
        %v1548 = vmax.f32 %v1453, 0.0
        %v1549 = vmax.f32 %v1455, 0.0
        %v1550 = vmax.f32 %v1506, 0.0
        %v1551 = vmax.f32 %v1508, 0.0
        %v1552 = vmax.f32 %v1141, 0.0
        %v1553 = vmax.f32 %v1143, 0.0
        %v1554 = vmax.f32 %v1194, 0.0
        %v1555 = vmax.f32 %v1196, 0.0
        %v1556 = vmax.f32 %v1247, 0.0
        %v1557 = vmax.f32 %v1249, 0.0
        %v1558 = vmax.f32 %v1300, 0.0
        %v1559 = vmax.f32 %v1302, 0.0
        %v1560 = vmax.f32 %v1353, 0.0
        %v1561 = vmax.f32 %v1355, 0.0
        %v1562 = vmax.f32 %v1406, 0.0
        %v1563 = vmax.f32 %v1408, 0.0
        %v1564 = vmax.f32 %v1459, 0.0
        %v1565 = vmax.f32 %v1461, 0.0
        %v1566 = vmax.f32 %v1512, 0.0
        %v1567 = vmax.f32 %v1514, 0.0
        %v1568 = vmax.f32 %v1145, 0.0
        %v1569 = vmax.f32 %v1147, 0.0
        %v1570 = vmax.f32 %v1198, 0.0
        %v1571 = vmax.f32 %v1200, 0.0
        %v1572 = vmax.f32 %v1251, 0.0
        %v1573 = vmax.f32 %v1253, 0.0
        %v1574 = vmax.f32 %v1304, 0.0
        %v1575 = vmax.f32 %v1306, 0.0
        %v1576 = vmax.f32 %v1357, 0.0
        %v1577 = vmax.f32 %v1359, 0.0
        %v1578 = vmax.f32 %v1410, 0.0
        %v1579 = vmax.f32 %v1412, 0.0
        %v1580 = vmax.f32 %v1463, 0.0
        %v1581 = vmax.f32 %v1465, 0.0
        %v1582 = vmax.f32 %v1516, 0.0
        %v1583 = vmax.f32 %v1518, 0.0
        %v1584 = vld [vmem:[%s3] sm:$0xf]
        %v1585 = vld [vmem:[%s3 + $0x4] sm:$0xf]
        %v1586 = vpack.c.bf16 %v1536, %v1520
        %v1587 = vpack.c.bf16 %v1537, %v1521
        %v1588 = vpack.c.bf16 %v1538, %v1522
        %v1589 = vpack.c.bf16 %v1539, %v1523
        %v1590 = vpack.c.bf16 %v1540, %v1524
        %v1591 = vpack.c.bf16 %v1541, %v1525
        %v1592 = vpack.c.bf16 %v1542, %v1526
        %v1593 = vpack.c.bf16 %v1543, %v1527
        %v1594 = vpack.c.bf16 %v1544, %v1528
        %v1595 = vpack.c.bf16 %v1545, %v1529
        %v1596 = vpack.c.bf16 %v1546, %v1530
        %v1597 = vpack.c.bf16 %v1547, %v1531
        %v1598 = vpack.c.bf16 %v1548, %v1532
        %v1599 = vpack.c.bf16 %v1549, %v1533
        %v1600 = vpack.c.bf16 %v1550, %v1534
        %v1601 = vpack.c.bf16 %v1551, %v1535
        %v1602 = vpack.c.bf16 %v1568, %v1552
        %v1603 = vpack.c.bf16 %v1569, %v1553
        %v1604 = vpack.c.bf16 %v1570, %v1554
        %v1605 = vpack.c.bf16 %v1571, %v1555
        %v1606 = vpack.c.bf16 %v1572, %v1556
        %v1607 = vpack.c.bf16 %v1573, %v1557
        %v1608 = vpack.c.bf16 %v1574, %v1558
        %v1609 = vpack.c.bf16 %v1575, %v1559
        %v1610 = vpack.c.bf16 %v1576, %v1560
        %v1611 = vpack.c.bf16 %v1577, %v1561
        %v1612 = vpack.c.bf16 %v1578, %v1562
        %v1613 = vpack.c.bf16 %v1579, %v1563
        %v1614 = vpack.c.bf16 %v1580, %v1564
        %v1615 = vpack.c.bf16 %v1581, %v1565
        %v1616 = vpack.c.bf16 %v1582, %v1566
        %v1617 = vpack.c.bf16 %v1583, %v1567
        %v1618 = vld [vmem:[%s4] sm:$0xff]
        %v1619 = vld [vmem:[%s4 + $0x8] sm:$0xff]
        %1621 = vset.pattern.permute.xlu0 0
        %1622 = vperm.xlu0 %1621, %v1618
        %v1623 = vpop.permute.xlu0 %1622
        %1626 = vset.pattern.permute.xlu0 0
        %1627 = vperm.xlu0 %1626, %v1619
        %v1628 = vpop.permute.xlu0 %1627
        %v1632 = vunpack.c.l.b16 %v1584
        %v1633 = vunpack.c.l.b16 %v1585
        %v1634 = vpack.c.b16 %v1633, %v1632
        %v1636 = vsel %vm705, %v1634, 0
        %1638 = vmatprep.subr.bf16.mxu0 %v1587
        %1639 = vmatpush1.bf16.msra.mxu0 %v1586
        %1640 = vmatprep.subr.bf16.mxu0 %v1603
        %1641 = vmatpush1.bf16.msra.mxu0 %v1602
        %1642 = vmatprep.subr.bf16.mxu0 0
        %1643 = vmatpush1.bf16.msra.mxu0 0
        %1644 = vmatprep.subr.bf16.mxu0 0
        %1645 = vmatpush1.bf16.msra.mxu0 0
        %1646 = vmatprep.subr.bf16.mxu0 0
        %1647 = vmatpush1.bf16.msra.mxu0 0
        %1648 = vmatprep.subr.bf16.mxu0 0
        %1649 = vmatpush1.bf16.msra.mxu0 0
        %1650 = vmatprep.subr.bf16.mxu0 0
        %1651 = vmatpush1.bf16.msra.mxu0 0
        %1652 = vmatprep.subr.bf16.mxu0 0
        %1653 = vmatpush1.bf16.msra.mxu0 0
        %1654 = vmatprep.subr.bf16.mxu0 0
        %1655 = vmatpush1.bf16.msra.mxu0 0
        %1656 = vmatprep.subr.bf16.mxu0 0
        %1657 = vmatpush1.bf16.msra.mxu0 0
        %1658 = vmatprep.subr.bf16.mxu0 0
        %1659 = vmatpush1.bf16.msra.mxu0 0
        %1660 = vmatprep.subr.bf16.mxu0 0
        %1661 = vmatpush1.bf16.msra.mxu0 0
        %1662 = vmatprep.subr.bf16.mxu0 0
        %1663 = vmatpush1.bf16.msra.mxu0 0
        %1664 = vmatprep.subr.bf16.mxu0 0
        %1665 = vmatpush1.bf16.msra.mxu0 0
        %1666 = vmatprep.subr.bf16.mxu0 0
        %1667 = vmatpush1.bf16.msra.mxu0 0
        %1668 = vmatprep.subr.bf16.mxu0 0
        %1669 = vmatpush1.bf16.msra.mxu0 0
        %1670 = vmatprep.mubr.bf16.mxu0 0
        %1671 = vmatmul.mubr.bf16.gmra.mrb[0].mxu0 %v1636
        %v1672 = vpop.f32.mrb[0].mxu0
        %v1673 = vadd.f32 %v1623, %v1672
        %v1674 = vpop.f32.mrb[0].mxu0
        %v1675 = vadd.f32 %v1623, %v1674
        %v1676 = vpop.f32.mrb[0].mxu0
        %v1677 = vadd.f32 %v1628, %v1676
        %v1678 = vpop.f32.mrb[0].mxu0
        %v1679 = vadd.f32 %v1628, %v1678
        %1680 = vdwg.mxu0
        %1681 = vmatprep.subr.bf16.mxu0 %v1589
        %1682 = vmatpush1.bf16.msra.mxu0 %v1588
        %1683 = vmatprep.subr.bf16.mxu0 %v1605
        %1684 = vmatpush1.bf16.msra.mxu0 %v1604
        %1685 = vmatprep.subr.bf16.mxu0 0
        %1686 = vmatpush1.bf16.msra.mxu0 0
        %1687 = vmatprep.subr.bf16.mxu0 0
        %1688 = vmatpush1.bf16.msra.mxu0 0
        %1689 = vmatprep.subr.bf16.mxu0 0
        %1690 = vmatpush1.bf16.msra.mxu0 0
        %1691 = vmatprep.subr.bf16.mxu0 0
        %1692 = vmatpush1.bf16.msra.mxu0 0
        %1693 = vmatprep.subr.bf16.mxu0 0
        %1694 = vmatpush1.bf16.msra.mxu0 0
        %1695 = vmatprep.subr.bf16.mxu0 0
        %1696 = vmatpush1.bf16.msra.mxu0 0
        %1697 = vmatprep.subr.bf16.mxu0 0
        %1698 = vmatpush1.bf16.msra.mxu0 0
        %1699 = vmatprep.subr.bf16.mxu0 0
        %1700 = vmatpush1.bf16.msra.mxu0 0
        %1701 = vmatprep.subr.bf16.mxu0 0
        %1702 = vmatpush1.bf16.msra.mxu0 0
        %1703 = vmatprep.subr.bf16.mxu0 0
        %1704 = vmatpush1.bf16.msra.mxu0 0
        %1705 = vmatprep.subr.bf16.mxu0 0
        %1706 = vmatpush1.bf16.msra.mxu0 0
        %1707 = vmatprep.subr.bf16.mxu0 0
        %1708 = vmatpush1.bf16.msra.mxu0 0
        %1709 = vmatprep.subr.bf16.mxu0 0
        %1710 = vmatpush1.bf16.msra.mxu0 0
        %1711 = vmatprep.subr.bf16.mxu0 0
        %1712 = vmatpush1.bf16.msra.mxu0 0
        %1713 = vmatprep.mubr.bf16.mxu0 0
        %1714 = vmatmul.mubr.bf16.gmra.mrb[0].mxu0 %v1636
        %v1715 = vpop.f32.mrb[0].mxu0
        %v1716 = vadd.f32 %v1623, %v1715
        %v1717 = vpop.f32.mrb[0].mxu0
        %v1718 = vadd.f32 %v1623, %v1717
        %v1719 = vpop.f32.mrb[0].mxu0
        %v1720 = vadd.f32 %v1628, %v1719
        %v1721 = vpop.f32.mrb[0].mxu0
        %v1722 = vadd.f32 %v1628, %v1721
        %1723 = vdwg.mxu0
        %1724 = vmatprep.subr.bf16.mxu0 %v1591
        %1725 = vmatpush1.bf16.msra.mxu0 %v1590
        %1726 = vmatprep.subr.bf16.mxu0 %v1607
        %1727 = vmatpush1.bf16.msra.mxu0 %v1606
        %1728 = vmatprep.subr.bf16.mxu0 0
        %1729 = vmatpush1.bf16.msra.mxu0 0
        %1730 = vmatprep.subr.bf16.mxu0 0
        %1731 = vmatpush1.bf16.msra.mxu0 0
        %1732 = vmatprep.subr.bf16.mxu0 0
        %1733 = vmatpush1.bf16.msra.mxu0 0
        %1734 = vmatprep.subr.bf16.mxu0 0
        %1735 = vmatpush1.bf16.msra.mxu0 0
        %1736 = vmatprep.subr.bf16.mxu0 0
        %1737 = vmatpush1.bf16.msra.mxu0 0
        %1738 = vmatprep.subr.bf16.mxu0 0
        %1739 = vmatpush1.bf16.msra.mxu0 0
        %1740 = vmatprep.subr.bf16.mxu0 0
        %1741 = vmatpush1.bf16.msra.mxu0 0
        %1742 = vmatprep.subr.bf16.mxu0 0
        %1743 = vmatpush1.bf16.msra.mxu0 0
        %1744 = vmatprep.subr.bf16.mxu0 0
        %1745 = vmatpush1.bf16.msra.mxu0 0
        %1746 = vmatprep.subr.bf16.mxu0 0
        %1747 = vmatpush1.bf16.msra.mxu0 0
        %1748 = vmatprep.subr.bf16.mxu0 0
        %1749 = vmatpush1.bf16.msra.mxu0 0
        %1750 = vmatprep.subr.bf16.mxu0 0
        %1751 = vmatpush1.bf16.msra.mxu0 0
        %1752 = vmatprep.subr.bf16.mxu0 0
        %1753 = vmatpush1.bf16.msra.mxu0 0
        %1754 = vmatprep.subr.bf16.mxu0 0
        %1755 = vmatpush1.bf16.msra.mxu0 0
        %1756 = vmatprep.mubr.bf16.mxu0 0
        %1757 = vmatmul.mubr.bf16.gmra.mrb[0].mxu0 %v1636
        %v1758 = vpop.f32.mrb[0].mxu0
        %v1759 = vadd.f32 %v1623, %v1758
        %v1760 = vpop.f32.mrb[0].mxu0
        %v1761 = vadd.f32 %v1623, %v1760
        %v1762 = vpop.f32.mrb[0].mxu0
        %v1763 = vadd.f32 %v1628, %v1762
        %v1764 = vpop.f32.mrb[0].mxu0
        %v1765 = vadd.f32 %v1628, %v1764
        %1766 = vdwg.mxu0
        %1767 = vmatprep.subr.bf16.mxu0 %v1593
        %1768 = vmatpush1.bf16.msra.mxu0 %v1592
        %1769 = vmatprep.subr.bf16.mxu0 %v1609
        %1770 = vmatpush1.bf16.msra.mxu0 %v1608
        %1771 = vmatprep.subr.bf16.mxu0 0
        %1772 = vmatpush1.bf16.msra.mxu0 0
        %1773 = vmatprep.subr.bf16.mxu0 0
        %1774 = vmatpush1.bf16.msra.mxu0 0
        %1775 = vmatprep.subr.bf16.mxu0 0
        %1776 = vmatpush1.bf16.msra.mxu0 0
        %1777 = vmatprep.subr.bf16.mxu0 0
        %1778 = vmatpush1.bf16.msra.mxu0 0
        %1779 = vmatprep.subr.bf16.mxu0 0
        %1780 = vmatpush1.bf16.msra.mxu0 0
        %1781 = vmatprep.subr.bf16.mxu0 0
        %1782 = vmatpush1.bf16.msra.mxu0 0
        %1783 = vmatprep.subr.bf16.mxu0 0
        %1784 = vmatpush1.bf16.msra.mxu0 0
        %1785 = vmatprep.subr.bf16.mxu0 0
        %1786 = vmatpush1.bf16.msra.mxu0 0
        %1787 = vmatprep.subr.bf16.mxu0 0
        %1788 = vmatpush1.bf16.msra.mxu0 0
        %1789 = vmatprep.subr.bf16.mxu0 0
        %1790 = vmatpush1.bf16.msra.mxu0 0
        %1791 = vmatprep.subr.bf16.mxu0 0
        %1792 = vmatpush1.bf16.msra.mxu0 0
        %1793 = vmatprep.subr.bf16.mxu0 0
        %1794 = vmatpush1.bf16.msra.mxu0 0
        %1795 = vmatprep.subr.bf16.mxu0 0
        %1796 = vmatpush1.bf16.msra.mxu0 0
        %1797 = vmatprep.subr.bf16.mxu0 0
        %1798 = vmatpush1.bf16.msra.mxu0 0
        %1799 = vmatprep.mubr.bf16.mxu0 0
        %1800 = vmatmul.mubr.bf16.gmra.mrb[0].mxu0 %v1636
        %v1801 = vpop.f32.mrb[0].mxu0
        %v1802 = vadd.f32 %v1623, %v1801
        %v1803 = vpop.f32.mrb[0].mxu0
        %v1804 = vadd.f32 %v1623, %v1803
        %v1805 = vpop.f32.mrb[0].mxu0
        %v1806 = vadd.f32 %v1628, %v1805
        %v1807 = vpop.f32.mrb[0].mxu0
        %v1808 = vadd.f32 %v1628, %v1807
        %1809 = vdwg.mxu0
        %1810 = vmatprep.subr.bf16.mxu0 %v1595
        %1811 = vmatpush1.bf16.msra.mxu0 %v1594
        %1812 = vmatprep.subr.bf16.mxu0 %v1611
        %1813 = vmatpush1.bf16.msra.mxu0 %v1610
        %1814 = vmatprep.subr.bf16.mxu0 0
        %1815 = vmatpush1.bf16.msra.mxu0 0
        %1816 = vmatprep.subr.bf16.mxu0 0
        %1817 = vmatpush1.bf16.msra.mxu0 0
        %1818 = vmatprep.subr.bf16.mxu0 0
        %1819 = vmatpush1.bf16.msra.mxu0 0
        %1820 = vmatprep.subr.bf16.mxu0 0
        %1821 = vmatpush1.bf16.msra.mxu0 0
        %1822 = vmatprep.subr.bf16.mxu0 0
        %1823 = vmatpush1.bf16.msra.mxu0 0
        %1824 = vmatprep.subr.bf16.mxu0 0
        %1825 = vmatpush1.bf16.msra.mxu0 0
        %1826 = vmatprep.subr.bf16.mxu0 0
        %1827 = vmatpush1.bf16.msra.mxu0 0
        %1828 = vmatprep.subr.bf16.mxu0 0
        %1829 = vmatpush1.bf16.msra.mxu0 0
        %1830 = vmatprep.subr.bf16.mxu0 0
        %1831 = vmatpush1.bf16.msra.mxu0 0
        %1832 = vmatprep.subr.bf16.mxu0 0
        %1833 = vmatpush1.bf16.msra.mxu0 0
        %1834 = vmatprep.subr.bf16.mxu0 0
        %1835 = vmatpush1.bf16.msra.mxu0 0
        %1836 = vmatprep.subr.bf16.mxu0 0
        %1837 = vmatpush1.bf16.msra.mxu0 0
        %1838 = vmatprep.subr.bf16.mxu0 0
        %1839 = vmatpush1.bf16.msra.mxu0 0
        %1840 = vmatprep.subr.bf16.mxu0 0
        %1841 = vmatpush1.bf16.msra.mxu0 0
        %1842 = vmatprep.mubr.bf16.mxu0 0
        %1843 = vmatmul.mubr.bf16.gmra.mrb[0].mxu0 %v1636
        %v1844 = vpop.f32.mrb[0].mxu0
        %v1845 = vadd.f32 %v1623, %v1844
        %v1846 = vpop.f32.mrb[0].mxu0
        %v1847 = vadd.f32 %v1623, %v1846
        %v1848 = vpop.f32.mrb[0].mxu0
        %v1849 = vadd.f32 %v1628, %v1848
        %v1850 = vpop.f32.mrb[0].mxu0
        %v1851 = vadd.f32 %v1628, %v1850
        %1852 = vdwg.mxu0
        %1853 = vmatprep.subr.bf16.mxu0 %v1597
        %1854 = vmatpush1.bf16.msra.mxu0 %v1596
        %1855 = vmatprep.subr.bf16.mxu0 %v1613
        %1856 = vmatpush1.bf16.msra.mxu0 %v1612
        %1857 = vmatprep.subr.bf16.mxu0 0
        %1858 = vmatpush1.bf16.msra.mxu0 0
        %1859 = vmatprep.subr.bf16.mxu0 0
        %1860 = vmatpush1.bf16.msra.mxu0 0
        %1861 = vmatprep.subr.bf16.mxu0 0
        %1862 = vmatpush1.bf16.msra.mxu0 0
        %1863 = vmatprep.subr.bf16.mxu0 0
        %1864 = vmatpush1.bf16.msra.mxu0 0
        %1865 = vmatprep.subr.bf16.mxu0 0
        %1866 = vmatpush1.bf16.msra.mxu0 0
        %1867 = vmatprep.subr.bf16.mxu0 0
        %1868 = vmatpush1.bf16.msra.mxu0 0
        %1869 = vmatprep.subr.bf16.mxu0 0
        %1870 = vmatpush1.bf16.msra.mxu0 0
        %1871 = vmatprep.subr.bf16.mxu0 0
        %1872 = vmatpush1.bf16.msra.mxu0 0
        %1873 = vmatprep.subr.bf16.mxu0 0
        %1874 = vmatpush1.bf16.msra.mxu0 0
        %1875 = vmatprep.subr.bf16.mxu0 0
        %1876 = vmatpush1.bf16.msra.mxu0 0
        %1877 = vmatprep.subr.bf16.mxu0 0
        %1878 = vmatpush1.bf16.msra.mxu0 0
        %1879 = vmatprep.subr.bf16.mxu0 0
        %1880 = vmatpush1.bf16.msra.mxu0 0
        %1881 = vmatprep.subr.bf16.mxu0 0
        %1882 = vmatpush1.bf16.msra.mxu0 0
        %1883 = vmatprep.subr.bf16.mxu0 0
        %1884 = vmatpush1.bf16.msra.mxu0 0
        %1885 = vmatprep.mubr.bf16.mxu0 0
        %1886 = vmatmul.mubr.bf16.gmra.mrb[0].mxu0 %v1636
        %v1887 = vpop.f32.mrb[0].mxu0
        %v1888 = vadd.f32 %v1623, %v1887
        %v1889 = vpop.f32.mrb[0].mxu0
        %v1890 = vadd.f32 %v1623, %v1889
        %v1891 = vpop.f32.mrb[0].mxu0
        %v1892 = vadd.f32 %v1628, %v1891
        %v1893 = vpop.f32.mrb[0].mxu0
        %v1894 = vadd.f32 %v1628, %v1893
        %1895 = vdwg.mxu0
        %1896 = vmatprep.subr.bf16.mxu0 %v1599
        %1897 = vmatpush1.bf16.msra.mxu0 %v1598
        %1898 = vmatprep.subr.bf16.mxu0 %v1615
        %1899 = vmatpush1.bf16.msra.mxu0 %v1614
        %1900 = vmatprep.subr.bf16.mxu0 0
        %1901 = vmatpush1.bf16.msra.mxu0 0
        %1902 = vmatprep.subr.bf16.mxu0 0
        %1903 = vmatpush1.bf16.msra.mxu0 0
        %1904 = vmatprep.subr.bf16.mxu0 0
        %1905 = vmatpush1.bf16.msra.mxu0 0
        %1906 = vmatprep.subr.bf16.mxu0 0
        %1907 = vmatpush1.bf16.msra.mxu0 0
        %1908 = vmatprep.subr.bf16.mxu0 0
        %1909 = vmatpush1.bf16.msra.mxu0 0
        %1910 = vmatprep.subr.bf16.mxu0 0
        %1911 = vmatpush1.bf16.msra.mxu0 0
        %1912 = vmatprep.subr.bf16.mxu0 0
        %1913 = vmatpush1.bf16.msra.mxu0 0
        %1914 = vmatprep.subr.bf16.mxu0 0
        %1915 = vmatpush1.bf16.msra.mxu0 0
        %1916 = vmatprep.subr.bf16.mxu0 0
        %1917 = vmatpush1.bf16.msra.mxu0 0
        %1918 = vmatprep.subr.bf16.mxu0 0
        %1919 = vmatpush1.bf16.msra.mxu0 0
        %1920 = vmatprep.subr.bf16.mxu0 0
        %1921 = vmatpush1.bf16.msra.mxu0 0
        %1922 = vmatprep.subr.bf16.mxu0 0
        %1923 = vmatpush1.bf16.msra.mxu0 0
        %1924 = vmatprep.subr.bf16.mxu0 0
        %1925 = vmatpush1.bf16.msra.mxu0 0
        %1926 = vmatprep.subr.bf16.mxu0 0
        %1927 = vmatpush1.bf16.msra.mxu0 0
        %1928 = vmatprep.mubr.bf16.mxu0 0
        %1929 = vmatmul.mubr.bf16.gmra.mrb[0].mxu0 %v1636
        %v1930 = vpop.f32.mrb[0].mxu0
        %v1931 = vadd.f32 %v1623, %v1930
        %v1932 = vpop.f32.mrb[0].mxu0
        %v1933 = vadd.f32 %v1623, %v1932
        %v1934 = vpop.f32.mrb[0].mxu0
        %v1935 = vadd.f32 %v1628, %v1934
        %v1936 = vpop.f32.mrb[0].mxu0
        %v1937 = vadd.f32 %v1628, %v1936
        %1938 = vdwg.mxu0
        %1939 = vmatprep.subr.bf16.mxu0 %v1601
        %1940 = vmatpush1.bf16.msra.mxu0 %v1600
        %1941 = vmatprep.subr.bf16.mxu0 %v1617
        %1942 = vmatpush1.bf16.msra.mxu0 %v1616
        %1943 = vmatprep.subr.bf16.mxu0 0
        %1944 = vmatpush1.bf16.msra.mxu0 0
        %1945 = vmatprep.subr.bf16.mxu0 0
        %1946 = vmatpush1.bf16.msra.mxu0 0
        %1947 = vmatprep.subr.bf16.mxu0 0
        %1948 = vmatpush1.bf16.msra.mxu0 0
        %1949 = vmatprep.subr.bf16.mxu0 0
        %1950 = vmatpush1.bf16.msra.mxu0 0
        %1951 = vmatprep.subr.bf16.mxu0 0
        %1952 = vmatpush1.bf16.msra.mxu0 0
        %1953 = vmatprep.subr.bf16.mxu0 0
        %1954 = vmatpush1.bf16.msra.mxu0 0
        %1955 = vmatprep.subr.bf16.mxu0 0
        %1956 = vmatpush1.bf16.msra.mxu0 0
        %1957 = vmatprep.subr.bf16.mxu0 0
        %1958 = vmatpush1.bf16.msra.mxu0 0
        %1959 = vmatprep.subr.bf16.mxu0 0
        %1960 = vmatpush1.bf16.msra.mxu0 0
        %1961 = vmatprep.subr.bf16.mxu0 0
        %1962 = vmatpush1.bf16.msra.mxu0 0
        %1963 = vmatprep.subr.bf16.mxu0 0
        %1964 = vmatpush1.bf16.msra.mxu0 0
        %1965 = vmatprep.subr.bf16.mxu0 0
        %1966 = vmatpush1.bf16.msra.mxu0 0
        %1967 = vmatprep.subr.bf16.mxu0 0
        %1968 = vmatpush1.bf16.msra.mxu0 0
        %1969 = vmatprep.subr.bf16.mxu0 0
        %1970 = vmatpush1.bf16.msra.mxu0 0
        %1971 = vmatprep.mubr.bf16.mxu0 0
        %1972 = vmatmul.mubr.bf16.gmra.mrb[0].mxu0 %v1636
        %v1973 = vpop.f32.mrb[0].mxu0
        %v1974 = vadd.f32 %v1623, %v1973
        %v1975 = vpop.f32.mrb[0].mxu0
        %v1976 = vadd.f32 %v1623, %v1975
        %v1977 = vpop.f32.mrb[0].mxu0
        %v1978 = vadd.f32 %v1628, %v1977
        %v1979 = vpop.f32.mrb[0].mxu0
        %v1980 = vadd.f32 %v1628, %v1979
        %1981 = vdwg.mxu0
        %v1982 = vmax.f32 %v1673, 0.0
        %v1983 = vmax.f32 %v1675, 0.0
        %v1984 = vmax.f32 %v1716, 0.0
        %v1985 = vmax.f32 %v1718, 0.0
        %v1986 = vmax.f32 %v1759, 0.0
        %v1987 = vmax.f32 %v1761, 0.0
        %v1988 = vmax.f32 %v1802, 0.0
        %v1989 = vmax.f32 %v1804, 0.0
        %v1990 = vmax.f32 %v1845, 0.0
        %v1991 = vmax.f32 %v1847, 0.0
        %v1992 = vmax.f32 %v1888, 0.0
        %v1993 = vmax.f32 %v1890, 0.0
        %v1994 = vmax.f32 %v1931, 0.0
        %v1995 = vmax.f32 %v1933, 0.0
        %v1996 = vmax.f32 %v1974, 0.0
        %v1997 = vmax.f32 %v1976, 0.0
        %v1998 = vmax.f32 %v1677, 0.0
        %v1999 = vmax.f32 %v1679, 0.0
        %v2000 = vmax.f32 %v1720, 0.0
        %v2001 = vmax.f32 %v1722, 0.0
        %v2002 = vmax.f32 %v1763, 0.0
        %v2003 = vmax.f32 %v1765, 0.0
        %v2004 = vmax.f32 %v1806, 0.0
        %v2005 = vmax.f32 %v1808, 0.0
        %v2006 = vmax.f32 %v1849, 0.0
        %v2007 = vmax.f32 %v1851, 0.0
        %v2008 = vmax.f32 %v1892, 0.0
        %v2009 = vmax.f32 %v1894, 0.0
        %v2010 = vmax.f32 %v1935, 0.0
        %v2011 = vmax.f32 %v1937, 0.0
        %v2012 = vmax.f32 %v1978, 0.0
        %v2013 = vmax.f32 %v1980, 0.0
        %v2014 = vld [vmem:[%s5] sm:$0xff]
        %v2015 = vld [vmem:[%s5 + $0x8] sm:$0xff]
        %2017 = vset.pattern.permute.xlu0 0
        %2018 = vperm.xlu0 %2017, %v2014
        %v2019 = vpop.permute.xlu0 %2018
        %2022 = vset.pattern.permute.xlu0 0
        %2023 = vperm.xlu0 %2022, %v2015
        %v2024 = vpop.permute.xlu0 %2023
        %v2026 = vmul.f32 %v1982, %v2019
        %v2027 = vmul.f32 %v1983, %v2019
        %v2028 = vmul.f32 %v1984, %v2019
        %v2029 = vmul.f32 %v1985, %v2019
        %v2030 = vmul.f32 %v1986, %v2019
        %v2031 = vmul.f32 %v1987, %v2019
        %v2032 = vmul.f32 %v1988, %v2019
        %v2033 = vmul.f32 %v1989, %v2019
        %v2034 = vmul.f32 %v1990, %v2019
        %v2035 = vmul.f32 %v1991, %v2019
        %v2036 = vmul.f32 %v1992, %v2019
        %v2037 = vmul.f32 %v1993, %v2019
        %v2038 = vmul.f32 %v1994, %v2019
        %v2039 = vmul.f32 %v1995, %v2019
        %v2040 = vmul.f32 %v1996, %v2019
        %v2041 = vmul.f32 %v1997, %v2019
        %v2042 = vmul.f32 %v1998, %v2024
        %v2043 = vmul.f32 %v1999, %v2024
        %v2044 = vmul.f32 %v2000, %v2024
        %v2045 = vmul.f32 %v2001, %v2024
        %v2046 = vmul.f32 %v2002, %v2024
        %v2047 = vmul.f32 %v2003, %v2024
        %v2048 = vmul.f32 %v2004, %v2024
        %v2049 = vmul.f32 %v2005, %v2024
        %v2050 = vmul.f32 %v2006, %v2024
        %v2051 = vmul.f32 %v2007, %v2024
        %v2052 = vmul.f32 %v2008, %v2024
        %v2053 = vmul.f32 %v2009, %v2024
        %v2054 = vmul.f32 %v2010, %v2024
        %v2055 = vmul.f32 %v2011, %v2024
        %v2056 = vmul.f32 %v2012, %v2024
        %v2057 = vmul.f32 %v2013, %v2024
        %v2058 = vadd.f32 %v2026, %v2042
        %v2059 = vrot.slane %v2058, 4
        %v2060 = vadd.f32 %v2058, %v2059
        %v2061 = vrot.slane %v2060, 2
        %v2062 = vadd.f32 %v2060, %v2061
        %v2063 = vrot.slane %v2062, 1
        %v2064 = vadd.f32 %v2062, %v2063
        %v2065 = vadd.f32 %v2027, %v2043
        %v2066 = vrot.slane %v2065, 4
        %v2067 = vadd.f32 %v2065, %v2066
        %v2068 = vrot.slane %v2067, 2
        %v2069 = vadd.f32 %v2067, %v2068
        %v2070 = vrot.slane %v2069, 1
        %v2071 = vadd.f32 %v2069, %v2070
        %v2072 = vadd.f32 %v2028, %v2044
        %v2073 = vrot.slane %v2072, 4
        %v2074 = vadd.f32 %v2072, %v2073
        %v2075 = vrot.slane %v2074, 2
        %v2076 = vadd.f32 %v2074, %v2075
        %v2077 = vrot.slane %v2076, 1
        %v2078 = vadd.f32 %v2076, %v2077
        %v2079 = vadd.f32 %v2029, %v2045
        %v2080 = vrot.slane %v2079, 4
        %v2081 = vadd.f32 %v2079, %v2080
        %v2082 = vrot.slane %v2081, 2
        %v2083 = vadd.f32 %v2081, %v2082
        %v2084 = vrot.slane %v2083, 1
        %v2085 = vadd.f32 %v2083, %v2084
        %v2086 = vadd.f32 %v2030, %v2046
        %v2087 = vrot.slane %v2086, 4
        %v2088 = vadd.f32 %v2086, %v2087
        %v2089 = vrot.slane %v2088, 2
        %v2090 = vadd.f32 %v2088, %v2089
        %v2091 = vrot.slane %v2090, 1
        %v2092 = vadd.f32 %v2090, %v2091
        %v2093 = vadd.f32 %v2031, %v2047
        %v2094 = vrot.slane %v2093, 4
        %v2095 = vadd.f32 %v2093, %v2094
        %v2096 = vrot.slane %v2095, 2
        %v2097 = vadd.f32 %v2095, %v2096
        %v2098 = vrot.slane %v2097, 1
        %v2099 = vadd.f32 %v2097, %v2098
        %v2100 = vadd.f32 %v2032, %v2048
        %v2101 = vrot.slane %v2100, 4
        %v2102 = vadd.f32 %v2100, %v2101
        %v2103 = vrot.slane %v2102, 2
        %v2104 = vadd.f32 %v2102, %v2103
        %v2105 = vrot.slane %v2104, 1
        %v2106 = vadd.f32 %v2104, %v2105
        %v2107 = vadd.f32 %v2033, %v2049
        %v2108 = vrot.slane %v2107, 4
        %v2109 = vadd.f32 %v2107, %v2108
        %v2110 = vrot.slane %v2109, 2
        %v2111 = vadd.f32 %v2109, %v2110
        %v2112 = vrot.slane %v2111, 1
        %v2113 = vadd.f32 %v2111, %v2112
        %v2114 = vadd.f32 %v2034, %v2050
        %v2115 = vrot.slane %v2114, 4
        %v2116 = vadd.f32 %v2114, %v2115
        %v2117 = vrot.slane %v2116, 2
        %v2118 = vadd.f32 %v2116, %v2117
        %v2119 = vrot.slane %v2118, 1
        %v2120 = vadd.f32 %v2118, %v2119
        %v2121 = vadd.f32 %v2035, %v2051
        %v2122 = vrot.slane %v2121, 4
        %v2123 = vadd.f32 %v2121, %v2122
        %v2124 = vrot.slane %v2123, 2
        %v2125 = vadd.f32 %v2123, %v2124
        %v2126 = vrot.slane %v2125, 1
        %v2127 = vadd.f32 %v2125, %v2126
        %v2128 = vadd.f32 %v2036, %v2052
        %v2129 = vrot.slane %v2128, 4
        %v2130 = vadd.f32 %v2128, %v2129
        %v2131 = vrot.slane %v2130, 2
        %v2132 = vadd.f32 %v2130, %v2131
        %v2133 = vrot.slane %v2132, 1
        %v2134 = vadd.f32 %v2132, %v2133
        %v2135 = vadd.f32 %v2037, %v2053
        %v2136 = vrot.slane %v2135, 4
        %v2137 = vadd.f32 %v2135, %v2136
        %v2138 = vrot.slane %v2137, 2
        %v2139 = vadd.f32 %v2137, %v2138
        %v2140 = vrot.slane %v2139, 1
        %v2141 = vadd.f32 %v2139, %v2140
        %v2142 = vadd.f32 %v2038, %v2054
        %v2143 = vrot.slane %v2142, 4
        %v2144 = vadd.f32 %v2142, %v2143
        %v2145 = vrot.slane %v2144, 2
        %v2146 = vadd.f32 %v2144, %v2145
        %v2147 = vrot.slane %v2146, 1
        %v2148 = vadd.f32 %v2146, %v2147
        %v2149 = vadd.f32 %v2039, %v2055
        %v2150 = vrot.slane %v2149, 4
        %v2151 = vadd.f32 %v2149, %v2150
        %v2152 = vrot.slane %v2151, 2
        %v2153 = vadd.f32 %v2151, %v2152
        %v2154 = vrot.slane %v2153, 1
        %v2155 = vadd.f32 %v2153, %v2154
        %v2156 = vadd.f32 %v2040, %v2056
        %v2157 = vrot.slane %v2156, 4
        %v2158 = vadd.f32 %v2156, %v2157
        %v2159 = vrot.slane %v2158, 2
        %v2160 = vadd.f32 %v2158, %v2159
        %v2161 = vrot.slane %v2160, 1
        %v2162 = vadd.f32 %v2160, %v2161
        %v2163 = vadd.f32 %v2041, %v2057
        %v2164 = vrot.slane %v2163, 4
        %v2165 = vadd.f32 %v2163, %v2164
        %v2166 = vrot.slane %v2165, 2
        %v2167 = vadd.f32 %v2165, %v2166
        %v2168 = vrot.slane %v2167, 1
        %v2169 = vadd.f32 %v2167, %v2168
        %v2170 = vld [vmem:[#allocation2] sm:$0x1]
        %2172 = vset.pattern.permute.xlu0 0
        %2173 = vperm.xlu0 %2172, %v2170
        %v2174 = vpop.permute.xlu0 %2173
        %v2176 = vlaneseq
        %v2177 = vshrl.u32 %v2176, 7
        %v2178 = vsub.s32 0, %v2177
        %v2179 = vrot.slane %v2174, %v2178
        %v2180 = vadd.f32 %v2064, %v2179
        %v2181 = vadd.f32 %v2071, %v2179
        %v2182 = vadd.f32 %v2078, %v2179
        %v2183 = vadd.f32 %v2085, %v2179
        %v2184 = vadd.f32 %v2092, %v2179
        %v2185 = vadd.f32 %v2099, %v2179
        %v2186 = vadd.f32 %v2106, %v2179
        %v2187 = vadd.f32 %v2113, %v2179
        %v2188 = vadd.f32 %v2120, %v2179
        %v2189 = vadd.f32 %v2127, %v2179
        %v2190 = vadd.f32 %v2134, %v2179
        %v2191 = vadd.f32 %v2141, %v2179
        %v2192 = vadd.f32 %v2148, %v2179
        %v2193 = vadd.f32 %v2155, %v2179
        %v2194 = vadd.f32 %v2162, %v2179
        %v2195 = vadd.f32 %v2169, %v2179
        %v2212 = vcombine.low %v2180, %v2181
        %v2213 = vcombine.low %v2182, %v2183
        %v2214 = vcombine.low %v2184, %v2185
        %v2215 = vcombine.low %v2186, %v2187
        %v2217 = vunpack.c.l.s4 1966171168
        %v2218 = vunpack.c.0.s8 %v2217
        %v2219 = vlaneseq
        %v2220 = vshrl.u32 %v2219, 7
        %v2221 = vsub.s32 %v2218, %v2220
        %v2222 = vrot.slane %v2212, %v2221
        %v2224 = vunpack.c.l.s4 1966171168
        %v2225 = vunpack.c.0.s8 %v2224
        %v2226 = vlaneseq
        %v2227 = vshrl.u32 %v2226, 7
        %v2228 = vsub.s32 %v2225, %v2227
        %v2229 = vrot.slane %v2213, %v2228
        %v2231 = vunpack.c.l.s4 1966171168
        %v2232 = vunpack.c.0.s8 %v2231
        %v2233 = vlaneseq
        %v2234 = vshrl.u32 %v2233, 7
        %v2235 = vsub.s32 %v2232, %v2234
        %v2236 = vrot.slane %v2214, %v2235
        %v2238 = vunpack.c.l.s4 1966171168
        %v2239 = vunpack.c.0.s8 %v2238
        %v2240 = vlaneseq
        %v2241 = vshrl.u32 %v2240, 7
        %v2242 = vsub.s32 %v2239, %v2241
        %v2243 = vrot.slane %v2215, %v2242
        %v2244 = vcombine.low %v2222, %v2229
        %v2245 = vcombine.low %v2236, %v2243
        %v2247 = vunpack.c.l.s4 1966171168
        %v2248 = vunpack.c.0.s8 %v2247
        %v2249 = vlaneseq
        %v2250 = vshrl.u32 %v2249, 7
        %v2251 = vsub.s32 %v2248, %v2250
        %v2252 = vrot.slane %v2244, %v2251
        %v2254 = vunpack.c.l.s4 1966171168
        %v2255 = vunpack.c.0.s8 %v2254
        %v2256 = vlaneseq
        %v2257 = vshrl.u32 %v2256, 7
        %v2258 = vsub.s32 %v2255, %v2257
        %v2259 = vrot.slane %v2245, %v2258
        %v2260 = vcombine.low %v2252, %v2259
        %v2261 = vcombine.low %v2188, %v2189
        %v2262 = vcombine.low %v2190, %v2191
        %v2263 = vcombine.low %v2192, %v2193
        %v2264 = vcombine.low %v2194, %v2195
        %v2266 = vunpack.c.l.s4 1966171168
        %v2267 = vunpack.c.0.s8 %v2266
        %v2268 = vlaneseq
        %v2269 = vshrl.u32 %v2268, 7
        %v2270 = vsub.s32 %v2267, %v2269
        %v2271 = vrot.slane %v2261, %v2270
        %v2273 = vunpack.c.l.s4 1966171168
        %v2274 = vunpack.c.0.s8 %v2273
        %v2275 = vlaneseq
        %v2276 = vshrl.u32 %v2275, 7
        %v2277 = vsub.s32 %v2274, %v2276
        %v2278 = vrot.slane %v2262, %v2277
        %v2280 = vunpack.c.l.s4 1966171168
        %v2281 = vunpack.c.0.s8 %v2280
        %v2282 = vlaneseq
        %v2283 = vshrl.u32 %v2282, 7
        %v2284 = vsub.s32 %v2281, %v2283
        %v2285 = vrot.slane %v2263, %v2284
        %v2287 = vunpack.c.l.s4 1966171168
        %v2288 = vunpack.c.0.s8 %v2287
        %v2289 = vlaneseq
        %v2290 = vshrl.u32 %v2289, 7
        %v2291 = vsub.s32 %v2288, %v2290
        %v2292 = vrot.slane %v2264, %v2291
        %v2293 = vcombine.low %v2271, %v2278
        %v2294 = vcombine.low %v2285, %v2292
        %v2296 = vunpack.c.l.s4 1966171168
        %v2297 = vunpack.c.0.s8 %v2296
        %v2298 = vlaneseq
        %v2299 = vshrl.u32 %v2298, 7
        %v2300 = vsub.s32 %v2297, %v2299
        %v2301 = vrot.slane %v2293, %v2300
        %v2303 = vunpack.c.l.s4 1966171168
        %v2304 = vunpack.c.0.s8 %v2303
        %v2305 = vlaneseq
        %v2306 = vshrl.u32 %v2305, 7
        %v2307 = vsub.s32 %v2304, %v2306
        %v2308 = vrot.slane %v2294, %v2307
        %v2309 = vcombine.low %v2301, %v2308
        %2312 = vst [vmem:[%s274] sm:$0xff] %v2260
        %2313 = vst [vmem:[%s274 + $0x8] sm:$0xff] %v2309
        %s2314 = sand.u32 %s183, 1
        %s2315 = scalar_lea.sflag [#allocation4], %s2314
        %s2316 = sand.u32 %s183, 1
        %s2317 = smul.addr %s2316, 16
        %s2318 = scalar_lea.vmem [#allocation3], %s2317
        // Predicated region
        $region49: #{tpu_custom_call.1} parent=47 // pred_check
          %p2319 = pneg %p193
        $region50: #{tpu_custom_call.1} parent=47 // pred_check_branch
          %2321 = sbr.rel (%p2319) target = $region52
        $region51: #{tpu_custom_call.1} parent=47 // pred_region
          %s2322 = smul.u32 16, %s23
          %s2324 = ssub.s32 256, 256
          %2325 = vsyncadd %s2315, %s2324
          %s2326 = smul.addr %s2322, 16
          %s2327 = scalar_lea.hbm %s7, %s2326
          %s2329 = sshll.u32 %s2318, 4
          %s2330 = int_to_ptr.vmem [resolvable:$true] %s2329
          %2332 = dma.vmem_to_hbm [thread:$0]  %s2330, 256, %s2327, %s2315
        $region52: #{tpu_custom_call.1} parent=47 // pred_fallthru
          _
      $region48: #{tpu_custom_call.1} parent=5 // pred_fallthru
        _
      %p2333 = scmp.le.s32.totalorder 2, %s18
      // Predicated region
      $region53: #{tpu_custom_call.1} parent=5 // pred_check
        %p2334 = pneg %p2333
      $region54: #{tpu_custom_call.1} parent=5 // pred_check_branch
        %2336 = sbr.rel (%p2334) target = $region56
      $region55: #{tpu_custom_call.1} parent=5 // pred_region
        %s2337 = ssub.s32 %s18, 2
        // Predicated region
        $region57: #{tpu_custom_call.1} parent=55 // pred_check
          %p2338 = pneg %p199
        $region58: #{tpu_custom_call.1} parent=55 // pred_check_branch
          %2340 = sbr.rel (%p2338) target = $region60
        $region59: #{tpu_custom_call.1} parent=55 // pred_region
          %s2341 = sand.u32 %s184, 1
          %s2342 = scalar_lea.sflag [#allocation4], %s2341
          %s2343 = sand.u32 %s184, 1
          %s2344 = smul.addr %s2343, 16
          %s2345 = scalar_lea.vmem [#allocation3], %s2344
          %2346 = dma.done %s2342, 256
        $region60: #{tpu_custom_call.1} parent=55 // pred_fallthru
          _
      $region56: #{tpu_custom_call.1} parent=5 // pred_fallthru
        _
    $region6: #{tpu_custom_call.1} parent=1 // loop_footer
      %s22 = sadd.s32 1, %s18
    $region7: #{tpu_custom_call.1} parent=1 // loop_footer_branch
      %17 = sbr.rel target = $region3
    $region8: #{tpu_custom_call.1} parent=1 // loop_exit
      _
    %2347 = vsyncpa [#allocation4], 1
    %s2348 = scalar_lea.sflag [#allocation4], 1
    %2349 = vsyncpa %s2348, 1

</llo_original>
